<compile_context>
chip_gen: v6e
topology: v6e:2x2x1
jax: 0.10.0
libtpu: 0.0.40
codegen_flags: <defaults>
</compile_context>

<pallas_src>
import functools

import numpy as np
import jax
import jax.numpy as jnp
from jax.experimental import pallas as pl
from jax.experimental.pallas import tpu as pltpu


# ----------------------------- Pallas kernel ------------------------------ #

def _inconv_kernel(x_ref, m_ref, shift_ref, w2_ref, b2_ref, o_ref, acc_ref, *,
                   kh, h, b, stride2, ho):
    """Fused 7x7 conv (+folded BN) + ReLU + stride-4 1x1 conv for B images.

    x_ref:     (1, hp*b, kpad)      bf16  padded rows, (row, image)-interleaved
    m_ref:     (kh, kpad, lanes1)   bf16  block-banded conv1 weights (BN scale folded)
    shift_ref: (1, lanes1)          f32   folded BN shift, tiled across W
    w2_ref:    (ho, lanes1, lanes2) bf16  banded stride-4 1x1 conv weights
    b2_ref:    (1, lanes2)          f32   conv2 bias, tiled across (ho, wo)
    o_ref:     (1, b, lanes2)       f32   lane-dense per-image output rows
    acc_ref:   (h*b, lanes1)        f32   VMEM scratch accumulator
    """
    rows = h * b
    # conv1 (+ folded BN scale): kh accumulating MXU matmuls, f32 acc in VMEM scratch.
    acc_ref[...] = jnp.dot(x_ref[0, pl.ds(0, rows), :], m_ref[0],
                           preferred_element_type=jnp.float32)
    for dy in range(1, kh):
        acc_ref[...] += jnp.dot(x_ref[0, pl.ds(dy * b, rows), :], m_ref[dy],
                                preferred_element_type=jnp.float32)

    # BN shift + ReLU only on the rows the stride-`stride2` conv2 reads.  Thanks to
    # the (row, image) interleave those rows form contiguous blocks of the
    # accumulator, and the banded conv2 matmuls accumulate straight into a
    # lane-dense (b, lanes2) output slab.
    y2 = jnp.zeros((b, o_ref.shape[2]), jnp.float32)
    for ho_ in range(ho):
        blk = acc_ref[pl.ds(ho_ * stride2 * b, b), :]
        y1 = jnp.maximum(blk + shift_ref[...], 0.0).astype(w2_ref.dtype)
        y2 = y2 + jnp.dot(y1, w2_ref[ho_], preferred_element_type=jnp.float32)
    o_ref[0] = (y2 + b2_ref[...]).astype(o_ref.dtype)


# ---------------------- parameter folding / packing ------------------------ #

def init_params(key, in_channel, out_channel):
    ks = jax.random.split(key, 8)
    w1 = 0.1 * jax.random.normal(ks[0], (out_channel, in_channel, 7, 7), jnp.float32)
    b1 = 0.1 * jax.random.normal(ks[1], (out_channel,), jnp.float32)
    gamma = 1.0 + 0.1 * jax.random.normal(ks[2], (out_channel,), jnp.float32)
    beta = 0.1 * jax.random.normal(ks[3], (out_channel,), jnp.float32)
    mean = 0.1 * jax.random.normal(ks[4], (out_channel,), jnp.float32)
    var = 1.0 + jnp.abs(0.1 * jax.random.normal(ks[5], (out_channel,), jnp.float32))
    w2 = 0.1 * jax.random.normal(ks[6], (out_channel, out_channel, 1, 1), jnp.float32)
    b2 = 0.1 * jax.random.normal(ks[7], (out_channel,), jnp.float32)
    return dict(w1=w1, b1=b1, gamma=gamma, beta=beta, mean=mean, var=var, w2=w2, b2=b2)


def build_inconv_arrays(params, H, W, *, stride2=4, eps=1e-5):
    """Fold conv1+BN and pack both convs into matmul-friendly matrices (static prep)."""
    p = {k: np.asarray(v) for k, v in params.items()}
    w1, b1 = p["w1"], p["b1"]
    gamma, beta, mean, var = p["gamma"], p["beta"], p["mean"], p["var"]
    w2, b2 = p["w2"], p["b2"]

    cout, cin, kh, kw = w1.shape
    cout2 = w2.shape[0]
    pad = kh // 2
    wp = W + 2 * pad
    hp = H + 2 * pad
    ho = (H - 1) // stride2 + 1
    wo = (W - 1) // stride2 + 1
    lanes1 = W * cout              # conv1 output lanes  (128 at the test size)
    lanes2 = ho * wo * cout2       # per-image flattened output lanes (128 at test size)
    kpad = ((wp * cin + 127) // 128) * 128   # contraction dim padded to full lanes

    s = gamma / np.sqrt(var + eps)
    w1f = w1 * s[:, None, None, None]                 # fold BN scale into conv1 weights
    shift = (b1 - mean) * s + beta                    # folded BN shift

    # Block-banded conv1 weights, zero-padded to kpad contraction rows:
    # M[dy, (w+dx)*cin + ci, w*cout + co] = w1f[co, ci, dy, dx]
    M = np.zeros((kh, kpad, lanes1), np.float32)
    for dy in range(kh):
        for dx in range(kw):
            blk = w1f[:, :, dy, dx].T                 # (cin, cout)
            for w in range(W):
                M[dy, (w + dx) * cin:(w + dx + 1) * cin, w * cout:(w + 1) * cout] = blk

    # Stride-4 1x1 conv as `ho` banded matrices that accumulate directly into the
    # lane-dense per-image output layout [ho_, wo_, co]:
    # W2big[ho_, (wo_*stride2)*cout + c, ho_*wo*cout2 + wo_*cout2 + co] = w2[co, c]
    w2_2d = w2[:, :, 0, 0].T                          # (cout, cout2)
    base = np.zeros((lanes1, wo * cout2), np.float32)
    for wo_ in range(wo):
        r0 = (wo_ * stride2) * cout
        base[r0:r0 + cout, wo_ * cout2:(wo_ + 1) * cout2] = w2_2d
    W2big = np.zeros((ho, lanes1, lanes2), np.float32)
    for ho_ in range(ho):
        W2big[ho_, :, ho_ * wo * cout2:(ho_ + 1) * wo * cout2] = base

    arrs = dict(
        m=jnp.asarray(M, jnp.bfloat16),
        shift=jnp.asarray(np.tile(shift, W)[None, :], jnp.float32),
        w2=jnp.asarray(W2big, jnp.bfloat16),
        b2=jnp.asarray(np.tile(b2, ho * wo)[None, :], jnp.float32),
    )
    meta = dict(cin=cin, cout=cout, cout2=cout2, kh=kh, pad=pad, stride2=stride2,
                ho=ho, wo=wo, wp=wp, hp=hp, kpad=kpad, lanes1=lanes1, lanes2=lanes2)
    return arrs, meta


# ------------------------------- forward ----------------------------------- #

def _pick_block_images(n, h, target_rows=256, min_rows=128):
    """Images per grid step: fill the MXU row dim (<= 256 rows), and when N allows
    keep >= 2 grid steps without dropping below 128 rows (v7x megacore)."""
    divs = [b for b in range(1, n + 1) if n % b == 0 and b * h <= target_rows]
    best = max(divs)
    if n // best == 1:
        alt = [b for b in divs if n // b >= 2 and b * h >= min_rows]
        if alt:
            best = max(alt)
    return best


def inconv_forward(x_nchw, arrs, meta):
    N, cin, H, W = x_nchw.shape
    kh, pad, stride2 = meta["kh"], meta["pad"], meta["stride2"]
    cout2 = meta["cout2"]
    ho, wo = meta["ho"], meta["wo"]
    hp, wp, kpad = meta["hp"], meta["wp"], meta["kpad"]
    lanes1, lanes2 = meta["lanes1"], meta["lanes2"]

    B = _pick_block_images(N, H)
    G = N // B

    # Host/XLA-side prep (one pass over the input): NCHW -> padded NHWC, flatten
    # (W, C) into lanes, zero-pad lanes to kpad, and interleave rows across the B
    # images of each group as (row, image) so every kernel access is a contiguous
    # pl.ds slice.  At large H/W this extra HBM copy should be folded into the
    # kernel via an in-kernel zero-padded VMEM stage; it is negligible at 16x16.
    x = jnp.transpose(x_nchw, (0, 2, 3, 1))                       # (N, H, W, cin)
    x = jnp.pad(x, ((0, 0), (pad, pad), (pad, pad), (0, 0)))      # (N, hp, wp, cin)
    x = x.reshape(N, hp, wp * cin)
    if kpad > wp * cin:
        x = jnp.pad(x, ((0, 0), (0, 0), (0, kpad - wp * cin)))
    x = x.astype(jnp.bfloat16)
    x = x.reshape(G, B, hp, kpad).transpose(0, 2, 1, 3).reshape(G, hp * B, kpad)

    kernel = functools.partial(_inconv_kernel, kh=kh, h=H, b=B, stride2=stride2, ho=ho)
    out = pl.pallas_call(
        kernel,
        out_shape=jax.ShapeDtypeStruct((G, B, lanes2), jnp.float32),
        grid=(G,),
        in_specs=[
            pl.BlockSpec((1, hp * B, kpad), lambda g: (g, 0, 0)),     # B images
            pl.BlockSpec((kh, kpad, lanes1), lambda g: (0, 0, 0)),    # conv1 W (resident)
            pl.BlockSpec((1, lanes1), lambda g: (0, 0)),              # BN shift
            pl.BlockSpec((ho, lanes1, lanes2), lambda g: (0, 0, 0)),  # conv2 W (resident)
            pl.BlockSpec((1, lanes2), lambda g: (0, 0)),              # conv2 bias
        ],
        out_specs=pl.BlockSpec((1, B, lanes2), lambda g: (g, 0, 0)),
        scratch_shapes=[pltpu.VMEM((H * B, lanes1), jnp.float32)],    # f32 accumulator
        compiler_params=pltpu.CompilerParams(dimension_semantics=("parallel",)),
    )(x, arrs["m"], arrs["shift"], arrs["w2"], arrs["b2"])

    out = out.reshape(N, ho, wo, cout2)
    return jnp.transpose(out, (0, 3, 1, 2))                       # -> NCHW


# ------------------------- pure-JAX reference ------------------------------ #

def reference_forward(x_nchw, p, eps=1e-5):
    dn = ("NCHW", "OIHW", "NCHW")
    y = jax.lax.conv_general_dilated(x_nchw, p["w1"], (1, 1), ((3, 3), (3, 3)),
                                     dimension_numbers=dn)
    y = y + p["b1"][None, :, None, None]
    s = p["gamma"] / jnp.sqrt(p["var"] + eps)
    y = (y - p["mean"][None, :, None, None]) * s[None, :, None, None] \
        + p["beta"][None, :, None, None]
    y = jnp.maximum(y, 0.0)
    y = jax.lax.conv_general_dilated(y, p["w2"], (4, 4), "VALID", dimension_numbers=dn)
    return y + p["b2"][None, :, None, None]


# --------------------------------- main ------------------------------------ #

if __name__ == "__main__":
    key = jax.random.PRNGKey(0)
    kx, kp = jax.random.split(key)

    in_channel, out_channel = 4, 8
    x = jax.random.normal(kx, (2, in_channel, 16, 16), jnp.float32)

    params = init_params(kp, in_channel, out_channel)
    arrs, meta = build_inconv_arrays(params, 16, 16)

    out = inconv_forward(x, arrs, meta)
    out = jax.block_until_ready(out)

    assert out.shape == (2, out_channel, 4, 4), out.shape
    assert bool(jnp.all(jnp.isfinite(out)))

    ref = reference_forward(x, params)
    max_err = float(jnp.max(jnp.abs(out - ref)))
    assert max_err < 1e-1, f"max abs err vs f32 reference: {max_err}"

    print("KERNEL_OK")
</pallas_src>

<mosaic_0001>
module attributes {stable_mosaic.version = 11 : i64} {
  func.func @_inconv_kernel(%arg0: i32, %arg1: memref<1x44x128xbf16, #tpu.memory_space<vmem>>, %arg2: memref<7x128x128xbf16, #tpu.memory_space<vmem>>, %arg3: memref<1x128xf32, #tpu.memory_space<vmem>>, %arg4: memref<4x128x128xbf16, #tpu.memory_space<vmem>>, %arg5: memref<1x128xf32, #tpu.memory_space<vmem>>, %arg6: memref<1x2x128xf32, #tpu.memory_space<vmem>>, %arg7: memref<32x128xf32, #tpu.memory_space<vmem>>) attributes {dimension_semantics = [#tpu.dimension_semantics<parallel>], iteration_bounds = array<i64: 1>, scalar_prefetch = 0 : i64, scratch_operands = 1 : i64, tpu.core_type = #tpu.core_type<tc>, window_params = [{transform_indices = @transform_0, window_bounds = array<i64: 1, 44, 128>}, {pipeline_mode = #tpu.pipeline_mode<synchronous>, transform_indices = @transform_1, window_bounds = array<i64: 7, 128, 128>}, {pipeline_mode = #tpu.pipeline_mode<synchronous>, transform_indices = @transform_2, window_bounds = array<i64: 1, 128>}, {pipeline_mode = #tpu.pipeline_mode<synchronous>, transform_indices = @transform_3, window_bounds = array<i64: 4, 128, 128>}, {pipeline_mode = #tpu.pipeline_mode<synchronous>, transform_indices = @transform_4, window_bounds = array<i64: 1, 128>}, {transform_indices = @transform_5, window_bounds = array<i64: 1, 2, 128>}]} {
    %c0 = arith.constant 0 : index
    %c0_0 = arith.constant 0 : index
    %c0_1 = arith.constant 0 : index
    %0 = vector.load %arg1[%c0, %c0_0, %c0_1] : memref<1x44x128xbf16, #tpu.memory_space<vmem>>, vector<1x32x128xbf16>
    %1 = vector.shape_cast %0 : vector<1x32x128xbf16> to vector<32x128xbf16>
    %c0_2 = arith.constant 0 : index
    %c0_3 = arith.constant 0 : index
    %c0_4 = arith.constant 0 : index
    %2 = vector.load %arg2[%c0_2, %c0_3, %c0_4] : memref<7x128x128xbf16, #tpu.memory_space<vmem>>, vector<1x128x128xbf16>
    %3 = vector.shape_cast %2 : vector<1x128x128xbf16> to vector<128x128xbf16>
    %cst = arith.constant dense<0.000000e+00> : vector<32x128xf32>
    %4 = tpu.matmul %1, %3, %cst {dimension_numbers = #tpu.dot_dimension_numbers<[1], [0], [0], [1], [0, 0, 1, 1], [], []>} : vector<32x128xbf16>, vector<128x128xbf16>, vector<32x128xf32> -> vector<32x128xf32>
    %c0_5 = arith.constant 0 : index
    %c0_6 = arith.constant 0 : index
    %5 = vector.load %arg7[%c0_5, %c0_6] : memref<32x128xf32, #tpu.memory_space<vmem>>, vector<32x128xf32>
    tpu.vector_store %arg7[%c0_5, %c0_6], %4 {strides = array<i32>} : memref<32x128xf32, #tpu.memory_space<vmem>>, vector<32x128xf32>,
    %c0_7 = arith.constant 0 : index
    %c0_8 = arith.constant 0 : index
    %6 = vector.load %arg7[%c0_7, %c0_8] : memref<32x128xf32, #tpu.memory_space<vmem>>, vector<32x128xf32>
    %c0_9 = arith.constant 0 : index
    %c2 = arith.constant 2 : index
    %c0_10 = arith.constant 0 : index
    %7 = vector.load %arg1[%c0_9, %c2, %c0_10] : memref<1x44x128xbf16, #tpu.memory_space<vmem>>, vector<1x32x128xbf16>
    %8 = vector.shape_cast %7 : vector<1x32x128xbf16> to vector<32x128xbf16>
    %c1 = arith.constant 1 : index
    %c0_11 = arith.constant 0 : index
    %c0_12 = arith.constant 0 : index
    %9 = vector.load %arg2[%c1, %c0_11, %c0_12] : memref<7x128x128xbf16, #tpu.memory_space<vmem>>, vector<1x128x128xbf16>
    %10 = vector.shape_cast %9 : vector<1x128x128xbf16> to vector<128x128xbf16>
    %cst_13 = arith.constant dense<0.000000e+00> : vector<32x128xf32>
    %11 = tpu.matmul %8, %10, %cst_13 {dimension_numbers = #tpu.dot_dimension_numbers<[1], [0], [0], [1], [0, 0, 1, 1], [], []>} : vector<32x128xbf16>, vector<128x128xbf16>, vector<32x128xf32> -> vector<32x128xf32>
    %12 = arith.addf %6, %11 : vector<32x128xf32>
    %c0_14 = arith.constant 0 : index
    %c0_15 = arith.constant 0 : index
    %13 = vector.load %arg7[%c0_14, %c0_15] : memref<32x128xf32, #tpu.memory_space<vmem>>, vector<32x128xf32>
    tpu.vector_store %arg7[%c0_14, %c0_15], %12 {strides = array<i32>} : memref<32x128xf32, #tpu.memory_space<vmem>>, vector<32x128xf32>,
    %c0_16 = arith.constant 0 : index
    %c0_17 = arith.constant 0 : index
    %14 = vector.load %arg7[%c0_16, %c0_17] : memref<32x128xf32, #tpu.memory_space<vmem>>, vector<32x128xf32>
    %c0_18 = arith.constant 0 : index
    %c4 = arith.constant 4 : index
    %c0_19 = arith.constant 0 : index
    %15 = vector.load %arg1[%c0_18, %c4, %c0_19] : memref<1x44x128xbf16, #tpu.memory_space<vmem>>, vector<1x32x128xbf16>
    %16 = vector.shape_cast %15 : vector<1x32x128xbf16> to vector<32x128xbf16>
    %c2_20 = arith.constant 2 : index
    %c0_21 = arith.constant 0 : index
    %c0_22 = arith.constant 0 : index
    %17 = vector.load %arg2[%c2_20, %c0_21, %c0_22] : memref<7x128x128xbf16, #tpu.memory_space<vmem>>, vector<1x128x128xbf16>
    %18 = vector.shape_cast %17 : vector<1x128x128xbf16> to vector<128x128xbf16>
    %cst_23 = arith.constant dense<0.000000e+00> : vector<32x128xf32>
    %19 = tpu.matmul %16, %18, %cst_23 {dimension_numbers = #tpu.dot_dimension_numbers<[1], [0], [0], [1], [0, 0, 1, 1], [], []>} : vector<32x128xbf16>, vector<128x128xbf16>, vector<32x128xf32> -> vector<32x128xf32>
    %20 = arith.addf %14, %19 : vector<32x128xf32>
    %c0_24 = arith.constant 0 : index
    %c0_25 = arith.constant 0 : index
    %21 = vector.load %arg7[%c0_24, %c0_25] : memref<32x128xf32, #tpu.memory_space<vmem>>, vector<32x128xf32>
    tpu.vector_store %arg7[%c0_24, %c0_25], %20 {strides = array<i32>} : memref<32x128xf32, #tpu.memory_space<vmem>>, vector<32x128xf32>,
    %c0_26 = arith.constant 0 : index
    %c0_27 = arith.constant 0 : index
    %22 = vector.load %arg7[%c0_26, %c0_27] : memref<32x128xf32, #tpu.memory_space<vmem>>, vector<32x128xf32>
    %c0_28 = arith.constant 0 : index
    %c6 = arith.constant 6 : index
    %c0_29 = arith.constant 0 : index
    %23 = vector.load %arg1[%c0_28, %c6, %c0_29] : memref<1x44x128xbf16, #tpu.memory_space<vmem>>, vector<1x32x128xbf16>
    %24 = vector.shape_cast %23 : vector<1x32x128xbf16> to vector<32x128xbf16>
    %c3 = arith.constant 3 : index
    %c0_30 = arith.constant 0 : index
    %c0_31 = arith.constant 0 : index
    %25 = vector.load %arg2[%c3, %c0_30, %c0_31] : memref<7x128x128xbf16, #tpu.memory_space<vmem>>, vector<1x128x128xbf16>
    %26 = vector.shape_cast %25 : vector<1x128x128xbf16> to vector<128x128xbf16>
    %cst_32 = arith.constant dense<0.000000e+00> : vector<32x128xf32>
    %27 = tpu.matmul %24, %26, %cst_32 {dimension_numbers = #tpu.dot_dimension_numbers<[1], [0], [0], [1], [0, 0, 1, 1], [], []>} : vector<32x128xbf16>, vector<128x128xbf16>, vector<32x128xf32> -> vector<32x128xf32>
    %28 = arith.addf %22, %27 : vector<32x128xf32>
    %c0_33 = arith.constant 0 : index
    %c0_34 = arith.constant 0 : index
    %29 = vector.load %arg7[%c0_33, %c0_34] : memref<32x128xf32, #tpu.memory_space<vmem>>, vector<32x128xf32>
    tpu.vector_store %arg7[%c0_33, %c0_34], %28 {strides = array<i32>} : memref<32x128xf32, #tpu.memory_space<vmem>>, vector<32x128xf32>,
    %c0_35 = arith.constant 0 : index
    %c0_36 = arith.constant 0 : index
    %30 = vector.load %arg7[%c0_35, %c0_36] : memref<32x128xf32, #tpu.memory_space<vmem>>, vector<32x128xf32>
    %c0_37 = arith.constant 0 : index
    %c8 = arith.constant 8 : index
    %c0_38 = arith.constant 0 : index
    %31 = vector.load %arg1[%c0_37, %c8, %c0_38] : memref<1x44x128xbf16, #tpu.memory_space<vmem>>, vector<1x32x128xbf16>
    %32 = vector.shape_cast %31 : vector<1x32x128xbf16> to vector<32x128xbf16>
    %c4_39 = arith.constant 4 : index
    %c0_40 = arith.constant 0 : index
    %c0_41 = arith.constant 0 : index
    %33 = vector.load %arg2[%c4_39, %c0_40, %c0_41] : memref<7x128x128xbf16, #tpu.memory_space<vmem>>, vector<1x128x128xbf16>
    %34 = vector.shape_cast %33 : vector<1x128x128xbf16> to vector<128x128xbf16>
    %cst_42 = arith.constant dense<0.000000e+00> : vector<32x128xf32>
    %35 = tpu.matmul %32, %34, %cst_42 {dimension_numbers = #tpu.dot_dimension_numbers<[1], [0], [0], [1], [0, 0, 1, 1], [], []>} : vector<32x128xbf16>, vector<128x128xbf16>, vector<32x128xf32> -> vector<32x128xf32>
    %36 = arith.addf %30, %35 : vector<32x128xf32>
    %c0_43 = arith.constant 0 : index
    %c0_44 = arith.constant 0 : index
    %37 = vector.load %arg7[%c0_43, %c0_44] : memref<32x128xf32, #tpu.memory_space<vmem>>, vector<32x128xf32>
    tpu.vector_store %arg7[%c0_43, %c0_44], %36 {strides = array<i32>} : memref<32x128xf32, #tpu.memory_space<vmem>>, vector<32x128xf32>,
    %c0_45 = arith.constant 0 : index
    %c0_46 = arith.constant 0 : index
    %38 = vector.load %arg7[%c0_45, %c0_46] : memref<32x128xf32, #tpu.memory_space<vmem>>, vector<32x128xf32>
    %c0_47 = arith.constant 0 : index
    %c10 = arith.constant 10 : index
    %c0_48 = arith.constant 0 : index
    %39 = vector.load %arg1[%c0_47, %c10, %c0_48] : memref<1x44x128xbf16, #tpu.memory_space<vmem>>, vector<1x32x128xbf16>
    %40 = vector.shape_cast %39 : vector<1x32x128xbf16> to vector<32x128xbf16>
    %c5 = arith.constant 5 : index
    %c0_49 = arith.constant 0 : index
    %c0_50 = arith.constant 0 : index
    %41 = vector.load %arg2[%c5, %c0_49, %c0_50] : memref<7x128x128xbf16, #tpu.memory_space<vmem>>, vector<1x128x128xbf16>
    %42 = vector.shape_cast %41 : vector<1x128x128xbf16> to vector<128x128xbf16>
    %cst_51 = arith.constant dense<0.000000e+00> : vector<32x128xf32>
    %43 = tpu.matmul %40, %42, %cst_51 {dimension_numbers = #tpu.dot_dimension_numbers<[1], [0], [0], [1], [0, 0, 1, 1], [], []>} : vector<32x128xbf16>, vector<128x128xbf16>, vector<32x128xf32> -> vector<32x128xf32>
    %44 = arith.addf %38, %43 : vector<32x128xf32>
    %c0_52 = arith.constant 0 : index
    %c0_53 = arith.constant 0 : index
    %45 = vector.load %arg7[%c0_52, %c0_53] : memref<32x128xf32, #tpu.memory_space<vmem>>, vector<32x128xf32>
    tpu.vector_store %arg7[%c0_52, %c0_53], %44 {strides = array<i32>} : memref<32x128xf32, #tpu.memory_space<vmem>>, vector<32x128xf32>,
    %c0_54 = arith.constant 0 : index
    %c0_55 = arith.constant 0 : index
    %46 = vector.load %arg7[%c0_54, %c0_55] : memref<32x128xf32, #tpu.memory_space<vmem>>, vector<32x128xf32>
    %c0_56 = arith.constant 0 : index
    %c12 = arith.constant 12 : index
    %c0_57 = arith.constant 0 : index
    %47 = vector.load %arg1[%c0_56, %c12, %c0_57] : memref<1x44x128xbf16, #tpu.memory_space<vmem>>, vector<1x32x128xbf16>
    %48 = vector.shape_cast %47 : vector<1x32x128xbf16> to vector<32x128xbf16>
    %c6_58 = arith.constant 6 : index
    %c0_59 = arith.constant 0 : index
    %c0_60 = arith.constant 0 : index
    %49 = vector.load %arg2[%c6_58, %c0_59, %c0_60] : memref<7x128x128xbf16, #tpu.memory_space<vmem>>, vector<1x128x128xbf16>
    %50 = vector.shape_cast %49 : vector<1x128x128xbf16> to vector<128x128xbf16>
    %cst_61 = arith.constant dense<0.000000e+00> : vector<32x128xf32>
    %51 = tpu.matmul %48, %50, %cst_61 {dimension_numbers = #tpu.dot_dimension_numbers<[1], [0], [0], [1], [0, 0, 1, 1], [], []>} : vector<32x128xbf16>, vector<128x128xbf16>, vector<32x128xf32> -> vector<32x128xf32>
    %52 = arith.addf %46, %51 : vector<32x128xf32>
    %c0_62 = arith.constant 0 : index
    %c0_63 = arith.constant 0 : index
    %53 = vector.load %arg7[%c0_62, %c0_63] : memref<32x128xf32, #tpu.memory_space<vmem>>, vector<32x128xf32>
    tpu.vector_store %arg7[%c0_62, %c0_63], %52 {strides = array<i32>} : memref<32x128xf32, #tpu.memory_space<vmem>>, vector<32x128xf32>,
    %cst_64 = arith.constant 0.000000e+00 : f32
    %54 = vector.broadcast %cst_64 : f32 to vector<2x128xf32>
    %c0_65 = arith.constant 0 : index
    %c0_66 = arith.constant 0 : index
    %55 = vector.load %arg7[%c0_65, %c0_66] : memref<32x128xf32, #tpu.memory_space<vmem>>, vector<2x128xf32>
    %c0_67 = arith.constant 0 : index
    %c0_68 = arith.constant 0 : index
    %56 = vector.load %arg3[%c0_67, %c0_68] : memref<1x128xf32, #tpu.memory_space<vmem>>, vector<1x128xf32>
    %57 = vector.broadcast %56 : vector<1x128xf32> to vector<2x128xf32>
    %58 = arith.addf %55, %57 : vector<2x128xf32>
    %cst_69 = arith.constant 0.000000e+00 : f32
    %59 = vector.broadcast %cst_69 : f32 to vector<2x128xf32>
    %60 = arith.maximumf %58, %59 : vector<2x128xf32>
    %61 = arith.truncf %60 : vector<2x128xf32> to vector<2x128xbf16>
    %c0_70 = arith.constant 0 : index
    %c0_71 = arith.constant 0 : index
    %c0_72 = arith.constant 0 : index
    %62 = vector.load %arg4[%c0_70, %c0_71, %c0_72] : memref<4x128x128xbf16, #tpu.memory_space<vmem>>, vector<1x128x128xbf16>
    %63 = vector.shape_cast %62 : vector<1x128x128xbf16> to vector<128x128xbf16>
    %cst_73 = arith.constant dense<0.000000e+00> : vector<2x128xf32>
    %64 = tpu.matmul %61, %63, %cst_73 {dimension_numbers = #tpu.dot_dimension_numbers<[1], [0], [0], [1], [0, 0, 1, 1], [], []>} : vector<2x128xbf16>, vector<128x128xbf16>, vector<2x128xf32> -> vector<2x128xf32>
    %65 = arith.addf %54, %64 : vector<2x128xf32>
    %c8_74 = arith.constant 8 : index
    %c0_75 = arith.constant 0 : index
    %66 = vector.load %arg7[%c8_74, %c0_75] : memref<32x128xf32, #tpu.memory_space<vmem>>, vector<2x128xf32>
    %c0_76 = arith.constant 0 : index
    %c0_77 = arith.constant 0 : index
    %67 = vector.load %arg3[%c0_76, %c0_77] : memref<1x128xf32, #tpu.memory_space<vmem>>, vector<1x128xf32>
    %68 = vector.broadcast %67 : vector<1x128xf32> to vector<2x128xf32>
    %69 = arith.addf %66, %68 : vector<2x128xf32>
    %cst_78 = arith.constant 0.000000e+00 : f32
    %70 = vector.broadcast %cst_78 : f32 to vector<2x128xf32>
    %71 = arith.maximumf %69, %70 : vector<2x128xf32>
    %72 = arith.truncf %71 : vector<2x128xf32> to vector<2x128xbf16>
    %c1_79 = arith.constant 1 : index
    %c0_80 = arith.constant 0 : index
    %c0_81 = arith.constant 0 : index
    %73 = vector.load %arg4[%c1_79, %c0_80, %c0_81] : memref<4x128x128xbf16, #tpu.memory_space<vmem>>, vector<1x128x128xbf16>
    %74 = vector.shape_cast %73 : vector<1x128x128xbf16> to vector<128x128xbf16>
    %cst_82 = arith.constant dense<0.000000e+00> : vector<2x128xf32>
    %75 = tpu.matmul %72, %74, %cst_82 {dimension_numbers = #tpu.dot_dimension_numbers<[1], [0], [0], [1], [0, 0, 1, 1], [], []>} : vector<2x128xbf16>, vector<128x128xbf16>, vector<2x128xf32> -> vector<2x128xf32>
    %76 = arith.addf %65, %75 : vector<2x128xf32>
    %c16 = arith.constant 16 : index
    %c0_83 = arith.constant 0 : index
    %77 = vector.load %arg7[%c16, %c0_83] : memref<32x128xf32, #tpu.memory_space<vmem>>, vector<2x128xf32>
    %c0_84 = arith.constant 0 : index
    %c0_85 = arith.constant 0 : index
    %78 = vector.load %arg3[%c0_84, %c0_85] : memref<1x128xf32, #tpu.memory_space<vmem>>, vector<1x128xf32>
    %79 = vector.broadcast %78 : vector<1x128xf32> to vector<2x128xf32>
    %80 = arith.addf %77, %79 : vector<2x128xf32>
    %cst_86 = arith.constant 0.000000e+00 : f32
    %81 = vector.broadcast %cst_86 : f32 to vector<2x128xf32>
    %82 = arith.maximumf %80, %81 : vector<2x128xf32>
    %83 = arith.truncf %82 : vector<2x128xf32> to vector<2x128xbf16>
    %c2_87 = arith.constant 2 : index
    %c0_88 = arith.constant 0 : index
    %c0_89 = arith.constant 0 : index
    %84 = vector.load %arg4[%c2_87, %c0_88, %c0_89] : memref<4x128x128xbf16, #tpu.memory_space<vmem>>, vector<1x128x128xbf16>
    %85 = vector.shape_cast %84 : vector<1x128x128xbf16> to vector<128x128xbf16>
    %cst_90 = arith.constant dense<0.000000e+00> : vector<2x128xf32>
    %86 = tpu.matmul %83, %85, %cst_90 {dimension_numbers = #tpu.dot_dimension_numbers<[1], [0], [0], [1], [0, 0, 1, 1], [], []>} : vector<2x128xbf16>, vector<128x128xbf16>, vector<2x128xf32> -> vector<2x128xf32>
    %87 = arith.addf %76, %86 : vector<2x128xf32>
    %c24 = arith.constant 24 : index
    %c0_91 = arith.constant 0 : index
    %88 = vector.load %arg7[%c24, %c0_91] : memref<32x128xf32, #tpu.memory_space<vmem>>, vector<2x128xf32>
    %c0_92 = arith.constant 0 : index
    %c0_93 = arith.constant 0 : index
    %89 = vector.load %arg3[%c0_92, %c0_93] : memref<1x128xf32, #tpu.memory_space<vmem>>, vector<1x128xf32>
    %90 = vector.broadcast %89 : vector<1x128xf32> to vector<2x128xf32>
    %91 = arith.addf %88, %90 : vector<2x128xf32>
    %cst_94 = arith.constant 0.000000e+00 : f32
    %92 = vector.broadcast %cst_94 : f32 to vector<2x128xf32>
    %93 = arith.maximumf %91, %92 : vector<2x128xf32>
    %94 = arith.truncf %93 : vector<2x128xf32> to vector<2x128xbf16>
    %c3_95 = arith.constant 3 : index
    %c0_96 = arith.constant 0 : index
    %c0_97 = arith.constant 0 : index
    %95 = vector.load %arg4[%c3_95, %c0_96, %c0_97] : memref<4x128x128xbf16, #tpu.memory_space<vmem>>, vector<1x128x128xbf16>
    %96 = vector.shape_cast %95 : vector<1x128x128xbf16> to vector<128x128xbf16>
    %cst_98 = arith.constant dense<0.000000e+00> : vector<2x128xf32>
    %97 = tpu.matmul %94, %96, %cst_98 {dimension_numbers = #tpu.dot_dimension_numbers<[1], [0], [0], [1], [0, 0, 1, 1], [], []>} : vector<2x128xbf16>, vector<128x128xbf16>, vector<2x128xf32> -> vector<2x128xf32>
    %98 = arith.addf %87, %97 : vector<2x128xf32>
    %c0_99 = arith.constant 0 : index
    %c0_100 = arith.constant 0 : index
    %99 = vector.load %arg5[%c0_99, %c0_100] : memref<1x128xf32, #tpu.memory_space<vmem>>, vector<1x128xf32>
    %100 = vector.broadcast %99 : vector<1x128xf32> to vector<2x128xf32>
    %101 = arith.addf %98, %100 : vector<2x128xf32>
    %c0_101 = arith.constant 0 : index
    %c0_102 = arith.constant 0 : index
    %c0_103 = arith.constant 0 : index
    %102 = vector.load %arg6[%c0_101, %c0_102, %c0_103] : memref<1x2x128xf32, #tpu.memory_space<vmem>>, vector<1x2x128xf32>
    %103 = vector.shape_cast %102 : vector<1x2x128xf32> to vector<2x128xf32>
    %104 = vector.shape_cast %101 : vector<2x128xf32> to vector<1x2x128xf32>
    tpu.vector_store %arg6[%c0_101, %c0_102, %c0_103], %104 {strides = array<i32>} : memref<1x2x128xf32, #tpu.memory_space<vmem>>, vector<1x2x128xf32>,
    return
  }
  func.func @transform_0(%arg0: i32) -> (i32, i32, i32) {
    %c0_i32 = arith.constant 0 : i32
    %c0_i32_0 = arith.constant 0 : i32
    %c0_i32_1 = arith.constant 0 : i32
    return %arg0, %c0_i32, %c0_i32_0 : i32, i32, i32
  }
  func.func @transform_1(%arg0: i32) -> (i32, i32, i32) {
    %c0_i32 = arith.constant 0 : i32
    %c0_i32_0 = arith.constant 0 : i32
    %c0_i32_1 = arith.constant 0 : i32
    %c0_i32_2 = arith.constant 0 : i32
    return %c0_i32, %c0_i32_0, %c0_i32_1 : i32, i32, i32
  }
  func.func @transform_2(%arg0: i32) -> (i32, i32) {
    %c0_i32 = arith.constant 0 : i32
    %c0_i32_0 = arith.constant 0 : i32
    %c0_i32_1 = arith.constant 0 : i32
    return %c0_i32, %c0_i32_0 : i32, i32
  }
  func.func @transform_3(%arg0: i32) -> (i32, i32, i32) {
    %c0_i32 = arith.constant 0 : i32
    %c0_i32_0 = arith.constant 0 : i32
    %c0_i32_1 = arith.constant 0 : i32
    %c0_i32_2 = arith.constant 0 : i32
    return %c0_i32, %c0_i32_0, %c0_i32_1 : i32, i32, i32
  }
  func.func @transform_4(%arg0: i32) -> (i32, i32) {
    %c0_i32 = arith.constant 0 : i32
    %c0_i32_0 = arith.constant 0 : i32
    %c0_i32_1 = arith.constant 0 : i32
    return %c0_i32, %c0_i32_0 : i32, i32
  }
  func.func @transform_5(%arg0: i32) -> (i32, i32, i32) {
    %c0_i32 = arith.constant 0 : i32
    %c0_i32_0 = arith.constant 0 : i32
    %c0_i32_1 = arith.constant 0 : i32
    return %arg0, %c0_i32, %c0_i32_0 : i32, i32, i32
  }
}

</mosaic_0001>

<llo_original>
// kernel: tpu_custom_call.1
$region0: #{tpu_custom_call.1}
  #allocation0 [shape = 'u32[]', space=smem, size = 0x4, offset = 0x4, fixed_abs, tag = 'smem constant byte address 0x4 - core index']
  #allocation1 [shape = 'u32[144,128]{1,0:T(1,128)}', space=vmem, size = 0x12000, scoped, tag = 'internal scratch']
  #allocation2 [shape = 'f32[32,128]{1,0:T(8,128)}', space=vmem, size = 0x4000, scoped, tag = 'scratch operand']
  %s0 = inlined_call_operand.hbm [shape: bf16[1,44,128], index: 0, kind: input, shape index: {}]
  %s1 = inlined_call_operand.hbm [shape: bf16[7,128,128], index: 1, kind: input, shape index: {}]
  %s2 = inlined_call_operand.vmem [shape: f32[1,128], index: 2, kind: input, shape index: {}]
  %s3 = inlined_call_operand.hbm [shape: bf16[4,128,128], index: 3, kind: input, shape index: {}]
  %s4 = inlined_call_operand.vmem [shape: f32[1,128], index: 4, kind: input, shape index: {}]
  %s5 = inlined_call_operand.hbm [shape: f32[1,2,128], index: 5, kind: output, shape index: {}]
  %s6 = sld [smem:[#allocation0]]
  $region42: #{tpu_custom_call.1} parent=0
    _
  %s8 = ssub.s32 1, %s6
  %s9 = scalar_select 0, %s8, %s6
  $region1: #{tpu_custom_call.1} parent=0
    #allocation3 [shape = 'u8[12288]{0}', space=vmem, size = 0x3000, scoped, tag = 'input window, operand 0, single buffered']
    #allocation4 [shape = 's32[1]{0}', space=sflag, size = 0x4, scoped, tag = 'scoped memory for tpu_custom_call.1']
    #allocation5 [shape = 's32[1]{0}', space=sflag, size = 0x4, scoped, tag = 'scoped memory for tpu_custom_call.1']
    #allocation6 [shape = 'u8[229376]{0}', space=vmem, size = 0x38000, scoped, tag = 'input window, operand 1, single buffered']
    #allocation7 [shape = 's32[1]{0}', space=sflag, size = 0x4, scoped, tag = 'scoped memory for tpu_custom_call.1']
    #allocation8 [shape = 'u8[131072]{0}', space=vmem, size = 0x20000, scoped, tag = 'input window, operand 3, single buffered']
    #allocation9 [shape = 'u8[1024]{0}', space=vmem, size = 0x400, scoped, tag = 'output window, operand 0, single buffered']
    %10 = vsyncpa [#allocation4], 0
    %11 = vsyncpa [#allocation7], 0
    %12 = vsyncpa [#allocation5], 0
    // Predicated region
    $region2: #{tpu_custom_call.1} parent=1 // pred_check
      _
    $region3: #{tpu_custom_call.1} parent=1 // pred_check_branch
      %14 = sbr.rel (0) target = $region5
    $region4: #{tpu_custom_call.1} parent=1 // pred_region
      %s16 = ssub.s32 384, 384
      %17 = vsyncadd [#allocation4], %s16
      %s18 = sshll.u32 [#allocation3], 4
      %s19 = int_to_ptr.vmem [resolvable:$true] %s18
      %24 = dma.hbm_to_vmem [thread:$0]  %s0, 384, %s19, [#allocation4], 64, 64, 4
    $region5: #{tpu_custom_call.1} parent=1 // pred_fallthru
      _
    // Predicated region
    $region6: #{tpu_custom_call.1} parent=1 // pred_check
      _
    $region7: #{tpu_custom_call.1} parent=1 // pred_check_branch
      %26 = sbr.rel (0) target = $region9
    $region8: #{tpu_custom_call.1} parent=1 // pred_region
      %s28 = ssub.s32 7168, 7168
      %29 = vsyncadd [#allocation7], %s28
      %s30 = sshll.u32 [#allocation6], 4
      %s31 = int_to_ptr.vmem [resolvable:$true] %s30
      %36 = dma.hbm_to_vmem [thread:$0]  %s1, 7168, %s31, [#allocation7], 64, 64, 4
    $region9: #{tpu_custom_call.1} parent=1 // pred_fallthru
      _
    // Predicated region
    $region10: #{tpu_custom_call.1} parent=1 // pred_check
      _
    $region11: #{tpu_custom_call.1} parent=1 // pred_check_branch
      %38 = sbr.rel (0) target = $region13
    $region12: #{tpu_custom_call.1} parent=1 // pred_region
      _
    $region13: #{tpu_custom_call.1} parent=1 // pred_fallthru
      _
    // Predicated region
    $region14: #{tpu_custom_call.1} parent=1 // pred_check
      _
    $region15: #{tpu_custom_call.1} parent=1 // pred_check_branch
      %40 = sbr.rel (0) target = $region17
    $region16: #{tpu_custom_call.1} parent=1 // pred_region
      %s42 = ssub.s32 4096, 4096
      %43 = vsyncadd [#allocation7], %s42
      %s44 = sshll.u32 [#allocation8], 4
      %s45 = int_to_ptr.vmem [resolvable:$true] %s44
      %50 = dma.hbm_to_vmem [thread:$0]  %s3, 4096, %s45, [#allocation7], 64, 64, 4
    $region17: #{tpu_custom_call.1} parent=1 // pred_fallthru
      _
    // Predicated region
    $region18: #{tpu_custom_call.1} parent=1 // pred_check
      _
    $region19: #{tpu_custom_call.1} parent=1 // pred_check_branch
      %52 = sbr.rel (0) target = $region21
    $region20: #{tpu_custom_call.1} parent=1 // pred_region
      _
    $region21: #{tpu_custom_call.1} parent=1 // pred_fallthru
      _
    // Predicated region
    $region22: #{tpu_custom_call.1} parent=1 // pred_check
      _
    $region23: #{tpu_custom_call.1} parent=1 // pred_check_branch
      %54 = sbr.rel (0) target = $region25
    $region24: #{tpu_custom_call.1} parent=1 // pred_region
      %55 = dma.done [#allocation4], 384
    $region25: #{tpu_custom_call.1} parent=1 // pred_fallthru
      _
    // Predicated region
    $region26: #{tpu_custom_call.1} parent=1 // pred_check
      _
    $region27: #{tpu_custom_call.1} parent=1 // pred_check_branch
      %57 = sbr.rel (0) target = $region29
    $region28: #{tpu_custom_call.1} parent=1 // pred_region
      %58 = dma.done [#allocation7], 7168
    $region29: #{tpu_custom_call.1} parent=1 // pred_fallthru
      _
    // Predicated region
    $region30: #{tpu_custom_call.1} parent=1 // pred_check
      _
    $region31: #{tpu_custom_call.1} parent=1 // pred_check_branch
      %60 = sbr.rel (0) target = $region33
    $region32: #{tpu_custom_call.1} parent=1 // pred_region
      %61 = dma.done [#allocation7], 4096
    $region33: #{tpu_custom_call.1} parent=1 // pred_fallthru
      _
    %v63 = vld [vmem:[#allocation3] sm:$0xf]
    %v64 = vld [vmem:[#allocation3 + $0x4] sm:$0xf]
    %v65 = vld [vmem:[#allocation3 + $0x8] sm:$0xf]
    %v66 = vld [vmem:[#allocation3 + $0xc] sm:$0xf]
    %v67 = vld [vmem:[#allocation6] sm:$0xf]
    %v68 = vld [vmem:[#allocation6 + $0x4] sm:$0xf]
    %v69 = vld [vmem:[#allocation6 + $0x8] sm:$0xf]
    %v70 = vld [vmem:[#allocation6 + $0xc] sm:$0xf]
    %v71 = vld [vmem:[#allocation6 + $0x10] sm:$0xf]
    %v72 = vld [vmem:[#allocation6 + $0x14] sm:$0xf]
    %v73 = vld [vmem:[#allocation6 + $0x18] sm:$0xf]
    %v74 = vld [vmem:[#allocation6 + $0x1c] sm:$0xf]
    %v75 = vld [vmem:[#allocation6 + $0x20] sm:$0xf]
    %v76 = vld [vmem:[#allocation6 + $0x24] sm:$0xf]
    %v77 = vld [vmem:[#allocation6 + $0x28] sm:$0xf]
    %v78 = vld [vmem:[#allocation6 + $0x2c] sm:$0xf]
    %v79 = vld [vmem:[#allocation6 + $0x30] sm:$0xf]
    %v80 = vld [vmem:[#allocation6 + $0x34] sm:$0xf]
    %v81 = vld [vmem:[#allocation6 + $0x38] sm:$0xf]
    %v82 = vld [vmem:[#allocation6 + $0x3c] sm:$0xf]
    %v87 = vunpack.c.l.b16 %v63
    %v88 = vunpack.c.l.b16 %v64
    %v89 = vunpack.c.l.b16 %v65
    %v90 = vunpack.c.l.b16 %v66
    %v91 = vpack.c.b16 %v88, %v87
    %v92 = vpack.c.b16 %v90, %v89
    %v111 = vunpack.c.l.b16 %v67
    %v112 = vunpack.c.l.b16 %v68
    %v113 = vunpack.c.l.b16 %v69
    %v114 = vunpack.c.l.b16 %v70
    %v115 = vunpack.c.l.b16 %v71
    %v116 = vunpack.c.l.b16 %v72
    %v117 = vunpack.c.l.b16 %v73
    %v118 = vunpack.c.l.b16 %v74
    %v119 = vunpack.c.l.b16 %v75
    %v120 = vunpack.c.l.b16 %v76
    %v121 = vunpack.c.l.b16 %v77
    %v122 = vunpack.c.l.b16 %v78
    %v123 = vunpack.c.l.b16 %v79
    %v124 = vunpack.c.l.b16 %v80
    %v125 = vunpack.c.l.b16 %v81
    %v126 = vunpack.c.l.b16 %v82
    %v127 = vpack.c.b16 %v112, %v111
    %v128 = vpack.c.b16 %v114, %v113
    %v129 = vpack.c.b16 %v116, %v115
    %v130 = vpack.c.b16 %v118, %v117
    %v131 = vpack.c.b16 %v120, %v119
    %v132 = vpack.c.b16 %v122, %v121
    %v133 = vpack.c.b16 %v124, %v123
    %v134 = vpack.c.b16 %v126, %v125
    %143 = vmatprep.subr.bf16.mxu0 0
    %144 = vmatpush1.bf16.msra.mxu0 %v134
    %145 = vmatprep.subr.bf16.mxu0 0
    %146 = vmatpush1.bf16.msra.mxu0 %v133
    %147 = vmatprep.subr.bf16.mxu0 0
    %148 = vmatpush1.bf16.msra.mxu0 %v132
    %149 = vmatprep.subr.bf16.mxu0 0
    %150 = vmatpush1.bf16.msra.mxu0 %v131
    %151 = vmatprep.subr.bf16.mxu0 0
    %152 = vmatpush1.bf16.msra.mxu0 %v130
    %153 = vmatprep.subr.bf16.mxu0 0
    %154 = vmatpush1.bf16.msra.mxu0 %v129
    %155 = vmatprep.subr.bf16.mxu0 0
    %156 = vmatpush1.bf16.msra.mxu0 %v128
    %157 = vmatprep.subr.bf16.mxu0 0
    %158 = vmatpush1.bf16.msra.mxu0 %v127
    %159 = vmatprep.subr.bf16.mxu0 0
    %160 = vmatpush2.bf16.msra.mxu0 0
    %161 = vmatprep.subr.bf16.mxu0 0
    %162 = vmatpush2.bf16.msra.mxu0 0
    %163 = vmatprep.subr.bf16.mxu0 0
    %164 = vmatpush2.bf16.msra.mxu0 0
    %165 = vmatprep.subr.bf16.mxu0 0
    %166 = vmatpush2.bf16.msra.mxu0 0
    %167 = vmatprep.subr.bf16.mxu0 0
    %168 = vmatpush2.bf16.msra.mxu0 0
    %169 = vmatprep.subr.bf16.mxu0 0
    %170 = vmatpush2.bf16.msra.mxu0 0
    %171 = vmatprep.subr.bf16.mxu0 0
    %172 = vmatpush2.bf16.msra.mxu0 0
    %173 = vmatprep.subr.bf16.mxu0 0
    %174 = vmatpush2.bf16.msra.mxu0 0
    %175 = vmatprep.mubr.bf16.mxu0 0
    %176 = vmatmul.mubr.bf16.gmra.mxu0 %v91
    %v177 = vpop.f32.mrf.mxu0
    %v178 = vadd.f32 0.0, %v177
    %v179 = vpop.f32.mrf.mxu0
    %v180 = vpop.f32.mrf.mxu0
    %v181 = vadd.f32 0.0, %v180
    %v182 = vpop.f32.mrf.mxu0
    %183 = vmatprep.mubr.bf16.mxu0 0
    %184 = vmatmul.mubr.bf16.gmra.mxu0 %v92
    %v185 = vpop.f32.mrf.mxu0
    %v186 = vadd.f32 0.0, %v185
    %v187 = vpop.f32.mrf.mxu0
    %v188 = vpop.f32.mrf.mxu0
    %v189 = vadd.f32 0.0, %v188
    %v190 = vpop.f32.mrf.mxu0
    %191 = vdwg.mxu0
    %192 = vst [vmem:[#allocation2] sm:$0xff] %v178
    %193 = vst [vmem:[#allocation2 + $0x8] sm:$0xff] %v181
    %194 = vst [vmem:[#allocation2 + $0x10] sm:$0xff] %v186
    %195 = vst [vmem:[#allocation2 + $0x18] sm:$0xff] %v189
    %v196 = vld [vmem:[#allocation2] sm:$0xff]
    %v197 = vld [vmem:[#allocation2 + $0x8] sm:$0xff]
    %v198 = vld [vmem:[#allocation2 + $0x10] sm:$0xff]
    %v199 = vld [vmem:[#allocation2 + $0x18] sm:$0xff]
    %v200 = vld [vmem:[#allocation3] sm:$0xe]
    %v201 = vld [vmem:[#allocation3 + $0x4] sm:$0xf]
    %v202 = vld [vmem:[#allocation3 + $0x8] sm:$0xf]
    %v203 = vld [vmem:[#allocation3 + $0xc] sm:$0xf]
    %v204 = vld [vmem:[#allocation3 + $0x10] sm:$0x1]
    %s205 = scalar_lea.vmem [#allocation6], 64
    %v206 = vld [vmem:[%s205] sm:$0xf]
    %v207 = vld [vmem:[%s205 + $0x4] sm:$0xf]
    %v208 = vld [vmem:[%s205 + $0x8] sm:$0xf]
    %v209 = vld [vmem:[%s205 + $0xc] sm:$0xf]
    %v210 = vld [vmem:[%s205 + $0x10] sm:$0xf]
    %v211 = vld [vmem:[%s205 + $0x14] sm:$0xf]
    %v212 = vld [vmem:[%s205 + $0x18] sm:$0xf]
    %v213 = vld [vmem:[%s205 + $0x1c] sm:$0xf]
    %v214 = vld [vmem:[%s205 + $0x20] sm:$0xf]
    %v215 = vld [vmem:[%s205 + $0x24] sm:$0xf]
    %v216 = vld [vmem:[%s205 + $0x28] sm:$0xf]
    %v217 = vld [vmem:[%s205 + $0x2c] sm:$0xf]
    %v218 = vld [vmem:[%s205 + $0x30] sm:$0xf]
    %v219 = vld [vmem:[%s205 + $0x34] sm:$0xf]
    %v220 = vld [vmem:[%s205 + $0x38] sm:$0xf]
    %v221 = vld [vmem:[%s205 + $0x3c] sm:$0xf]
    %v227 = vunpack.c.l.b16 %v200
    %v228 = vunpack.c.l.b16 %v201
    %v229 = vunpack.c.l.b16 %v202
    %v230 = vunpack.c.l.b16 %v203
    %v231 = vunpack.c.l.b16 %v204
    %v232 = vpack.c.b16 %v228, %v227
    %v233 = vpack.c.b16 %v230, %v229
    %v234 = vpack.c.b16 %v231, %v231
    %vm235 = vcmask 1046528
    %v236 = vrot.slane %v232, 1
    %v237 = vrot.slane %v233, 1
    %v238 = vsel %vm235, %v236, %v237
    %v239 = vrot.slane %v234, 1
    %v240 = vsel %vm235, %v237, %v239
    %v259 = vunpack.c.l.b16 %v206
    %v260 = vunpack.c.l.b16 %v207
    %v261 = vunpack.c.l.b16 %v208
    %v262 = vunpack.c.l.b16 %v209
    %v263 = vunpack.c.l.b16 %v210
    %v264 = vunpack.c.l.b16 %v211
    %v265 = vunpack.c.l.b16 %v212
    %v266 = vunpack.c.l.b16 %v213
    %v267 = vunpack.c.l.b16 %v214
    %v268 = vunpack.c.l.b16 %v215
    %v269 = vunpack.c.l.b16 %v216
    %v270 = vunpack.c.l.b16 %v217
    %v271 = vunpack.c.l.b16 %v218
    %v272 = vunpack.c.l.b16 %v219
    %v273 = vunpack.c.l.b16 %v220
    %v274 = vunpack.c.l.b16 %v221
    %v275 = vpack.c.b16 %v260, %v259
    %v276 = vpack.c.b16 %v262, %v261
    %v277 = vpack.c.b16 %v264, %v263
    %v278 = vpack.c.b16 %v266, %v265
    %v279 = vpack.c.b16 %v268, %v267
    %v280 = vpack.c.b16 %v270, %v269
    %v281 = vpack.c.b16 %v272, %v271
    %v282 = vpack.c.b16 %v274, %v273
    %291 = vmatprep.subr.bf16.mxu0 0
    %292 = vmatpush1.bf16.msra.mxu0 %v282
    %293 = vmatprep.subr.bf16.mxu0 0
    %294 = vmatpush1.bf16.msra.mxu0 %v281
    %295 = vmatprep.subr.bf16.mxu0 0
    %296 = vmatpush1.bf16.msra.mxu0 %v280
    %297 = vmatprep.subr.bf16.mxu0 0
    %298 = vmatpush1.bf16.msra.mxu0 %v279
    %299 = vmatprep.subr.bf16.mxu0 0
    %300 = vmatpush1.bf16.msra.mxu0 %v278
    %301 = vmatprep.subr.bf16.mxu0 0
    %302 = vmatpush1.bf16.msra.mxu0 %v277
    %303 = vmatprep.subr.bf16.mxu0 0
    %304 = vmatpush1.bf16.msra.mxu0 %v276
    %305 = vmatprep.subr.bf16.mxu0 0
    %306 = vmatpush1.bf16.msra.mxu0 %v275
    %307 = vmatprep.subr.bf16.mxu0 0
    %308 = vmatpush2.bf16.msra.mxu0 0
    %309 = vmatprep.subr.bf16.mxu0 0
    %310 = vmatpush2.bf16.msra.mxu0 0
    %311 = vmatprep.subr.bf16.mxu0 0
    %312 = vmatpush2.bf16.msra.mxu0 0
    %313 = vmatprep.subr.bf16.mxu0 0
    %314 = vmatpush2.bf16.msra.mxu0 0
    %315 = vmatprep.subr.bf16.mxu0 0
    %316 = vmatpush2.bf16.msra.mxu0 0
    %317 = vmatprep.subr.bf16.mxu0 0
    %318 = vmatpush2.bf16.msra.mxu0 0
    %319 = vmatprep.subr.bf16.mxu0 0
    %320 = vmatpush2.bf16.msra.mxu0 0
    %321 = vmatprep.subr.bf16.mxu0 0
    %322 = vmatpush2.bf16.msra.mxu0 0
    %323 = vmatprep.mubr.bf16.mxu0 0
    %324 = vmatmul.mubr.bf16.gmra.mxu0 %v238
    %v325 = vpop.f32.mrf.mxu0
    %v326 = vadd.f32 0.0, %v325
    %v327 = vpop.f32.mrf.mxu0
    %v328 = vpop.f32.mrf.mxu0
    %v329 = vadd.f32 0.0, %v328
    %v330 = vpop.f32.mrf.mxu0
    %331 = vmatprep.mubr.bf16.mxu0 0
    %332 = vmatmul.mubr.bf16.gmra.mxu0 %v240
    %v333 = vpop.f32.mrf.mxu0
    %v334 = vadd.f32 0.0, %v333
    %v335 = vpop.f32.mrf.mxu0
    %v336 = vpop.f32.mrf.mxu0
    %v337 = vadd.f32 0.0, %v336
    %v338 = vpop.f32.mrf.mxu0
    %339 = vdwg.mxu0
    %v340 = vadd.f32 %v196, %v326
    %v341 = vadd.f32 %v197, %v329
    %v342 = vadd.f32 %v198, %v334
    %v343 = vadd.f32 %v199, %v337
    %344 = vst [vmem:[#allocation2] sm:$0xff] %v340
    %345 = vst [vmem:[#allocation2 + $0x8] sm:$0xff] %v341
    %346 = vst [vmem:[#allocation2 + $0x10] sm:$0xff] %v342
    %347 = vst [vmem:[#allocation2 + $0x18] sm:$0xff] %v343
    %v348 = vld [vmem:[#allocation2] sm:$0xff]
    %v349 = vld [vmem:[#allocation2 + $0x8] sm:$0xff]
    %v350 = vld [vmem:[#allocation2 + $0x10] sm:$0xff]
    %v351 = vld [vmem:[#allocation2 + $0x18] sm:$0xff]
    %v352 = vld [vmem:[#allocation3] sm:$0xc]
    %v353 = vld [vmem:[#allocation3 + $0x4] sm:$0xf]
    %v354 = vld [vmem:[#allocation3 + $0x8] sm:$0xf]
    %v355 = vld [vmem:[#allocation3 + $0xc] sm:$0xf]
    %v356 = vld [vmem:[#allocation3 + $0x10] sm:$0x3]
    %s357 = scalar_lea.vmem [#allocation6], 128
    %v358 = vld [vmem:[%s357] sm:$0xf]
    %v359 = vld [vmem:[%s357 + $0x4] sm:$0xf]
    %v360 = vld [vmem:[%s357 + $0x8] sm:$0xf]
    %v361 = vld [vmem:[%s357 + $0xc] sm:$0xf]
    %v362 = vld [vmem:[%s357 + $0x10] sm:$0xf]
    %v363 = vld [vmem:[%s357 + $0x14] sm:$0xf]
    %v364 = vld [vmem:[%s357 + $0x18] sm:$0xf]
    %v365 = vld [vmem:[%s357 + $0x1c] sm:$0xf]
    %v366 = vld [vmem:[%s357 + $0x20] sm:$0xf]
    %v367 = vld [vmem:[%s357 + $0x24] sm:$0xf]
    %v368 = vld [vmem:[%s357 + $0x28] sm:$0xf]
    %v369 = vld [vmem:[%s357 + $0x2c] sm:$0xf]
    %v370 = vld [vmem:[%s357 + $0x30] sm:$0xf]
    %v371 = vld [vmem:[%s357 + $0x34] sm:$0xf]
    %v372 = vld [vmem:[%s357 + $0x38] sm:$0xf]
    %v373 = vld [vmem:[%s357 + $0x3c] sm:$0xf]
    %v379 = vunpack.c.l.b16 %v352
    %v380 = vunpack.c.l.b16 %v353
    %v381 = vunpack.c.l.b16 %v354
    %v382 = vunpack.c.l.b16 %v355
    %v383 = vunpack.c.l.b16 %v356
    %v384 = vpack.c.b16 %v380, %v379
    %v385 = vpack.c.b16 %v382, %v381
    %v386 = vpack.c.b16 %v383, %v383
    %vm387 = vcmask 1045504
    %v388 = vrot.slane %v384, 2
    %v389 = vrot.slane %v385, 2
    %v390 = vsel %vm387, %v388, %v389
    %v391 = vrot.slane %v386, 2
    %v392 = vsel %vm387, %v389, %v391
    %v411 = vunpack.c.l.b16 %v358
    %v412 = vunpack.c.l.b16 %v359
    %v413 = vunpack.c.l.b16 %v360
    %v414 = vunpack.c.l.b16 %v361
    %v415 = vunpack.c.l.b16 %v362
    %v416 = vunpack.c.l.b16 %v363
    %v417 = vunpack.c.l.b16 %v364
    %v418 = vunpack.c.l.b16 %v365
    %v419 = vunpack.c.l.b16 %v366
    %v420 = vunpack.c.l.b16 %v367
    %v421 = vunpack.c.l.b16 %v368
    %v422 = vunpack.c.l.b16 %v369
    %v423 = vunpack.c.l.b16 %v370
    %v424 = vunpack.c.l.b16 %v371
    %v425 = vunpack.c.l.b16 %v372
    %v426 = vunpack.c.l.b16 %v373
    %v427 = vpack.c.b16 %v412, %v411
    %v428 = vpack.c.b16 %v414, %v413
    %v429 = vpack.c.b16 %v416, %v415
    %v430 = vpack.c.b16 %v418, %v417
    %v431 = vpack.c.b16 %v420, %v419
    %v432 = vpack.c.b16 %v422, %v421
    %v433 = vpack.c.b16 %v424, %v423
    %v434 = vpack.c.b16 %v426, %v425
    %443 = vmatprep.subr.bf16.mxu0 0
    %444 = vmatpush1.bf16.msra.mxu0 %v434
    %445 = vmatprep.subr.bf16.mxu0 0
    %446 = vmatpush1.bf16.msra.mxu0 %v433
    %447 = vmatprep.subr.bf16.mxu0 0
    %448 = vmatpush1.bf16.msra.mxu0 %v432
    %449 = vmatprep.subr.bf16.mxu0 0
    %450 = vmatpush1.bf16.msra.mxu0 %v431
    %451 = vmatprep.subr.bf16.mxu0 0
    %452 = vmatpush1.bf16.msra.mxu0 %v430
    %453 = vmatprep.subr.bf16.mxu0 0
    %454 = vmatpush1.bf16.msra.mxu0 %v429
    %455 = vmatprep.subr.bf16.mxu0 0
    %456 = vmatpush1.bf16.msra.mxu0 %v428
    %457 = vmatprep.subr.bf16.mxu0 0
    %458 = vmatpush1.bf16.msra.mxu0 %v427
    %459 = vmatprep.subr.bf16.mxu0 0
    %460 = vmatpush2.bf16.msra.mxu0 0
    %461 = vmatprep.subr.bf16.mxu0 0
    %462 = vmatpush2.bf16.msra.mxu0 0
    %463 = vmatprep.subr.bf16.mxu0 0
    %464 = vmatpush2.bf16.msra.mxu0 0
    %465 = vmatprep.subr.bf16.mxu0 0
    %466 = vmatpush2.bf16.msra.mxu0 0
    %467 = vmatprep.subr.bf16.mxu0 0
    %468 = vmatpush2.bf16.msra.mxu0 0
    %469 = vmatprep.subr.bf16.mxu0 0
    %470 = vmatpush2.bf16.msra.mxu0 0
    %471 = vmatprep.subr.bf16.mxu0 0
    %472 = vmatpush2.bf16.msra.mxu0 0
    %473 = vmatprep.subr.bf16.mxu0 0
    %474 = vmatpush2.bf16.msra.mxu0 0
    %475 = vmatprep.mubr.bf16.mxu0 0
    %476 = vmatmul.mubr.bf16.gmra.mxu0 %v390
    %v477 = vpop.f32.mrf.mxu0
    %v478 = vadd.f32 0.0, %v477
    %v479 = vpop.f32.mrf.mxu0
    %v480 = vpop.f32.mrf.mxu0
    %v481 = vadd.f32 0.0, %v480
    %v482 = vpop.f32.mrf.mxu0
    %483 = vmatprep.mubr.bf16.mxu0 0
    %484 = vmatmul.mubr.bf16.gmra.mxu0 %v392
    %v485 = vpop.f32.mrf.mxu0
    %v486 = vadd.f32 0.0, %v485
    %v487 = vpop.f32.mrf.mxu0
    %v488 = vpop.f32.mrf.mxu0
    %v489 = vadd.f32 0.0, %v488
    %v490 = vpop.f32.mrf.mxu0
    %491 = vdwg.mxu0
    %v492 = vadd.f32 %v348, %v478
    %v493 = vadd.f32 %v349, %v481
    %v494 = vadd.f32 %v350, %v486
    %v495 = vadd.f32 %v351, %v489
    %496 = vst [vmem:[#allocation2] sm:$0xff] %v492
    %497 = vst [vmem:[#allocation2 + $0x8] sm:$0xff] %v493
    %498 = vst [vmem:[#allocation2 + $0x10] sm:$0xff] %v494
    %499 = vst [vmem:[#allocation2 + $0x18] sm:$0xff] %v495
    %v500 = vld [vmem:[#allocation2] sm:$0xff]
    %v501 = vld [vmem:[#allocation2 + $0x8] sm:$0xff]
    %v502 = vld [vmem:[#allocation2 + $0x10] sm:$0xff]
    %v503 = vld [vmem:[#allocation2 + $0x18] sm:$0xff]
    %v504 = vld [vmem:[#allocation3] sm:$0x8]
    %v505 = vld [vmem:[#allocation3 + $0x4] sm:$0xf]
    %v506 = vld [vmem:[#allocation3 + $0x8] sm:$0xf]
    %v507 = vld [vmem:[#allocation3 + $0xc] sm:$0xf]
    %v508 = vld [vmem:[#allocation3 + $0x10] sm:$0x7]
    %s509 = scalar_lea.vmem [#allocation6], 192
    %v510 = vld [vmem:[%s509] sm:$0xf]
    %v511 = vld [vmem:[%s509 + $0x4] sm:$0xf]
    %v512 = vld [vmem:[%s509 + $0x8] sm:$0xf]
    %v513 = vld [vmem:[%s509 + $0xc] sm:$0xf]
    %v514 = vld [vmem:[%s509 + $0x10] sm:$0xf]
    %v515 = vld [vmem:[%s509 + $0x14] sm:$0xf]
    %v516 = vld [vmem:[%s509 + $0x18] sm:$0xf]
    %v517 = vld [vmem:[%s509 + $0x1c] sm:$0xf]
    %v518 = vld [vmem:[%s509 + $0x20] sm:$0xf]
    %v519 = vld [vmem:[%s509 + $0x24] sm:$0xf]
    %v520 = vld [vmem:[%s509 + $0x28] sm:$0xf]
    %v521 = vld [vmem:[%s509 + $0x2c] sm:$0xf]
    %v522 = vld [vmem:[%s509 + $0x30] sm:$0xf]
    %v523 = vld [vmem:[%s509 + $0x34] sm:$0xf]
    %v524 = vld [vmem:[%s509 + $0x38] sm:$0xf]
    %v525 = vld [vmem:[%s509 + $0x3c] sm:$0xf]
    %v531 = vunpack.c.l.b16 %v504
    %v532 = vunpack.c.l.b16 %v505
    %v533 = vunpack.c.l.b16 %v506
    %v534 = vunpack.c.l.b16 %v507
    %v535 = vunpack.c.l.b16 %v508
    %v536 = vpack.c.b16 %v532, %v531
    %v537 = vpack.c.b16 %v534, %v533
    %v538 = vpack.c.b16 %v535, %v535
    %vm539 = vcmask 1044480
    %v540 = vrot.slane %v536, 3
    %v541 = vrot.slane %v537, 3
    %v542 = vsel %vm539, %v540, %v541
    %v543 = vrot.slane %v538, 3
    %v544 = vsel %vm539, %v541, %v543
    %v563 = vunpack.c.l.b16 %v510
    %v564 = vunpack.c.l.b16 %v511
    %v565 = vunpack.c.l.b16 %v512
    %v566 = vunpack.c.l.b16 %v513
    %v567 = vunpack.c.l.b16 %v514
    %v568 = vunpack.c.l.b16 %v515
    %v569 = vunpack.c.l.b16 %v516
    %v570 = vunpack.c.l.b16 %v517
    %v571 = vunpack.c.l.b16 %v518
    %v572 = vunpack.c.l.b16 %v519
    %v573 = vunpack.c.l.b16 %v520
    %v574 = vunpack.c.l.b16 %v521
    %v575 = vunpack.c.l.b16 %v522
    %v576 = vunpack.c.l.b16 %v523
    %v577 = vunpack.c.l.b16 %v524
    %v578 = vunpack.c.l.b16 %v525
    %v579 = vpack.c.b16 %v564, %v563
    %v580 = vpack.c.b16 %v566, %v565
    %v581 = vpack.c.b16 %v568, %v567
    %v582 = vpack.c.b16 %v570, %v569
    %v583 = vpack.c.b16 %v572, %v571
    %v584 = vpack.c.b16 %v574, %v573
    %v585 = vpack.c.b16 %v576, %v575
    %v586 = vpack.c.b16 %v578, %v577
    %595 = vmatprep.subr.bf16.mxu0 0
    %596 = vmatpush1.bf16.msra.mxu0 %v586
    %597 = vmatprep.subr.bf16.mxu0 0
    %598 = vmatpush1.bf16.msra.mxu0 %v585
    %599 = vmatprep.subr.bf16.mxu0 0
    %600 = vmatpush1.bf16.msra.mxu0 %v584
    %601 = vmatprep.subr.bf16.mxu0 0
    %602 = vmatpush1.bf16.msra.mxu0 %v583
    %603 = vmatprep.subr.bf16.mxu0 0
    %604 = vmatpush1.bf16.msra.mxu0 %v582
    %605 = vmatprep.subr.bf16.mxu0 0
    %606 = vmatpush1.bf16.msra.mxu0 %v581
    %607 = vmatprep.subr.bf16.mxu0 0
    %608 = vmatpush1.bf16.msra.mxu0 %v580
    %609 = vmatprep.subr.bf16.mxu0 0
    %610 = vmatpush1.bf16.msra.mxu0 %v579
    %611 = vmatprep.subr.bf16.mxu0 0
    %612 = vmatpush2.bf16.msra.mxu0 0
    %613 = vmatprep.subr.bf16.mxu0 0
    %614 = vmatpush2.bf16.msra.mxu0 0
    %615 = vmatprep.subr.bf16.mxu0 0
    %616 = vmatpush2.bf16.msra.mxu0 0
    %617 = vmatprep.subr.bf16.mxu0 0
    %618 = vmatpush2.bf16.msra.mxu0 0
    %619 = vmatprep.subr.bf16.mxu0 0
    %620 = vmatpush2.bf16.msra.mxu0 0
    %621 = vmatprep.subr.bf16.mxu0 0
    %622 = vmatpush2.bf16.msra.mxu0 0
    %623 = vmatprep.subr.bf16.mxu0 0
    %624 = vmatpush2.bf16.msra.mxu0 0
    %625 = vmatprep.subr.bf16.mxu0 0
    %626 = vmatpush2.bf16.msra.mxu0 0
    %627 = vmatprep.mubr.bf16.mxu0 0
    %628 = vmatmul.mubr.bf16.gmra.mxu0 %v542
    %v629 = vpop.f32.mrf.mxu0
    %v630 = vadd.f32 0.0, %v629
    %v631 = vpop.f32.mrf.mxu0
    %v632 = vpop.f32.mrf.mxu0
    %v633 = vadd.f32 0.0, %v632
    %v634 = vpop.f32.mrf.mxu0
    %635 = vmatprep.mubr.bf16.mxu0 0
    %636 = vmatmul.mubr.bf16.gmra.mxu0 %v544
    %v637 = vpop.f32.mrf.mxu0
    %v638 = vadd.f32 0.0, %v637
    %v639 = vpop.f32.mrf.mxu0
    %v640 = vpop.f32.mrf.mxu0
    %v641 = vadd.f32 0.0, %v640
    %v642 = vpop.f32.mrf.mxu0
    %643 = vdwg.mxu0
    %v644 = vadd.f32 %v500, %v630
    %v645 = vadd.f32 %v501, %v633
    %v646 = vadd.f32 %v502, %v638
    %v647 = vadd.f32 %v503, %v641
    %648 = vst [vmem:[#allocation2] sm:$0xff] %v644
    %649 = vst [vmem:[#allocation2 + $0x8] sm:$0xff] %v645
    %650 = vst [vmem:[#allocation2 + $0x10] sm:$0xff] %v646
    %651 = vst [vmem:[#allocation2 + $0x18] sm:$0xff] %v647
    %v652 = vld [vmem:[#allocation2] sm:$0xff]
    %v653 = vld [vmem:[#allocation2 + $0x8] sm:$0xff]
    %v654 = vld [vmem:[#allocation2 + $0x10] sm:$0xff]
    %v655 = vld [vmem:[#allocation2 + $0x18] sm:$0xff]
    %v656 = vld [vmem:[#allocation3 + $0x4] sm:$0xf]
    %v657 = vld [vmem:[#allocation3 + $0x8] sm:$0xf]
    %v658 = vld [vmem:[#allocation3 + $0xc] sm:$0xf]
    %v659 = vld [vmem:[#allocation3 + $0x10] sm:$0xf]
    %s660 = scalar_lea.vmem [#allocation6], 256
    %v661 = vld [vmem:[%s660] sm:$0xf]
    %v662 = vld [vmem:[%s660 + $0x4] sm:$0xf]
    %v663 = vld [vmem:[%s660 + $0x8] sm:$0xf]
    %v664 = vld [vmem:[%s660 + $0xc] sm:$0xf]
    %v665 = vld [vmem:[%s660 + $0x10] sm:$0xf]
    %v666 = vld [vmem:[%s660 + $0x14] sm:$0xf]
    %v667 = vld [vmem:[%s660 + $0x18] sm:$0xf]
    %v668 = vld [vmem:[%s660 + $0x1c] sm:$0xf]
    %v669 = vld [vmem:[%s660 + $0x20] sm:$0xf]
    %v670 = vld [vmem:[%s660 + $0x24] sm:$0xf]
    %v671 = vld [vmem:[%s660 + $0x28] sm:$0xf]
    %v672 = vld [vmem:[%s660 + $0x2c] sm:$0xf]
    %v673 = vld [vmem:[%s660 + $0x30] sm:$0xf]
    %v674 = vld [vmem:[%s660 + $0x34] sm:$0xf]
    %v675 = vld [vmem:[%s660 + $0x38] sm:$0xf]
    %v676 = vld [vmem:[%s660 + $0x3c] sm:$0xf]
    %v681 = vunpack.c.l.b16 %v656
    %v682 = vunpack.c.l.b16 %v657
    %v683 = vunpack.c.l.b16 %v658
    %v684 = vunpack.c.l.b16 %v659
    %v685 = vpack.c.b16 %v682, %v681
    %v686 = vpack.c.b16 %v684, %v683
    %v705 = vunpack.c.l.b16 %v661
    %v706 = vunpack.c.l.b16 %v662
    %v707 = vunpack.c.l.b16 %v663
    %v708 = vunpack.c.l.b16 %v664
    %v709 = vunpack.c.l.b16 %v665
    %v710 = vunpack.c.l.b16 %v666
    %v711 = vunpack.c.l.b16 %v667
    %v712 = vunpack.c.l.b16 %v668
    %v713 = vunpack.c.l.b16 %v669
    %v714 = vunpack.c.l.b16 %v670
    %v715 = vunpack.c.l.b16 %v671
    %v716 = vunpack.c.l.b16 %v672
    %v717 = vunpack.c.l.b16 %v673
    %v718 = vunpack.c.l.b16 %v674
    %v719 = vunpack.c.l.b16 %v675
    %v720 = vunpack.c.l.b16 %v676
    %v721 = vpack.c.b16 %v706, %v705
    %v722 = vpack.c.b16 %v708, %v707
    %v723 = vpack.c.b16 %v710, %v709
    %v724 = vpack.c.b16 %v712, %v711
    %v725 = vpack.c.b16 %v714, %v713
    %v726 = vpack.c.b16 %v716, %v715
    %v727 = vpack.c.b16 %v718, %v717
    %v728 = vpack.c.b16 %v720, %v719
    %737 = vmatprep.subr.bf16.mxu0 0
    %738 = vmatpush1.bf16.msra.mxu0 %v728
    %739 = vmatprep.subr.bf16.mxu0 0
    %740 = vmatpush1.bf16.msra.mxu0 %v727
    %741 = vmatprep.subr.bf16.mxu0 0
    %742 = vmatpush1.bf16.msra.mxu0 %v726
    %743 = vmatprep.subr.bf16.mxu0 0
    %744 = vmatpush1.bf16.msra.mxu0 %v725
    %745 = vmatprep.subr.bf16.mxu0 0
    %746 = vmatpush1.bf16.msra.mxu0 %v724
    %747 = vmatprep.subr.bf16.mxu0 0
    %748 = vmatpush1.bf16.msra.mxu0 %v723
    %749 = vmatprep.subr.bf16.mxu0 0
    %750 = vmatpush1.bf16.msra.mxu0 %v722
    %751 = vmatprep.subr.bf16.mxu0 0
    %752 = vmatpush1.bf16.msra.mxu0 %v721
    %753 = vmatprep.subr.bf16.mxu0 0
    %754 = vmatpush2.bf16.msra.mxu0 0
    %755 = vmatprep.subr.bf16.mxu0 0
    %756 = vmatpush2.bf16.msra.mxu0 0
    %757 = vmatprep.subr.bf16.mxu0 0
    %758 = vmatpush2.bf16.msra.mxu0 0
    %759 = vmatprep.subr.bf16.mxu0 0
    %760 = vmatpush2.bf16.msra.mxu0 0
    %761 = vmatprep.subr.bf16.mxu0 0
    %762 = vmatpush2.bf16.msra.mxu0 0
    %763 = vmatprep.subr.bf16.mxu0 0
    %764 = vmatpush2.bf16.msra.mxu0 0
    %765 = vmatprep.subr.bf16.mxu0 0
    %766 = vmatpush2.bf16.msra.mxu0 0
    %767 = vmatprep.subr.bf16.mxu0 0
    %768 = vmatpush2.bf16.msra.mxu0 0
    %769 = vmatprep.mubr.bf16.mxu0 0
    %770 = vmatmul.mubr.bf16.gmra.mxu0 %v685
    %v771 = vpop.f32.mrf.mxu0
    %v772 = vadd.f32 0.0, %v771
    %v773 = vpop.f32.mrf.mxu0
    %v774 = vpop.f32.mrf.mxu0
    %v775 = vadd.f32 0.0, %v774
    %v776 = vpop.f32.mrf.mxu0
    %777 = vmatprep.mubr.bf16.mxu0 0
    %778 = vmatmul.mubr.bf16.gmra.mxu0 %v686
    %v779 = vpop.f32.mrf.mxu0
    %v780 = vadd.f32 0.0, %v779
    %v781 = vpop.f32.mrf.mxu0
    %v782 = vpop.f32.mrf.mxu0
    %v783 = vadd.f32 0.0, %v782
    %v784 = vpop.f32.mrf.mxu0
    %785 = vdwg.mxu0
    %v786 = vadd.f32 %v652, %v772
    %v787 = vadd.f32 %v653, %v775
    %v788 = vadd.f32 %v654, %v780
    %v789 = vadd.f32 %v655, %v783
    %790 = vst [vmem:[#allocation2] sm:$0xff] %v786
    %791 = vst [vmem:[#allocation2 + $0x8] sm:$0xff] %v787
    %792 = vst [vmem:[#allocation2 + $0x10] sm:$0xff] %v788
    %793 = vst [vmem:[#allocation2 + $0x18] sm:$0xff] %v789
    %v794 = vld [vmem:[#allocation2] sm:$0xff]
    %v795 = vld [vmem:[#allocation2 + $0x8] sm:$0xff]
    %v796 = vld [vmem:[#allocation2 + $0x10] sm:$0xff]
    %v797 = vld [vmem:[#allocation2 + $0x18] sm:$0xff]
    %v798 = vld [vmem:[#allocation3 + $0x4] sm:$0xe]
    %v799 = vld [vmem:[#allocation3 + $0x8] sm:$0xf]
    %v800 = vld [vmem:[#allocation3 + $0xc] sm:$0xf]
    %v801 = vld [vmem:[#allocation3 + $0x10] sm:$0xf]
    %v802 = vld [vmem:[#allocation3 + $0x14] sm:$0x1]
    %s803 = scalar_lea.vmem [#allocation6], 320
    %v804 = vld [vmem:[%s803] sm:$0xf]
    %v805 = vld [vmem:[%s803 + $0x4] sm:$0xf]
    %v806 = vld [vmem:[%s803 + $0x8] sm:$0xf]
    %v807 = vld [vmem:[%s803 + $0xc] sm:$0xf]
    %v808 = vld [vmem:[%s803 + $0x10] sm:$0xf]
    %v809 = vld [vmem:[%s803 + $0x14] sm:$0xf]
    %v810 = vld [vmem:[%s803 + $0x18] sm:$0xf]
    %v811 = vld [vmem:[%s803 + $0x1c] sm:$0xf]
    %v812 = vld [vmem:[%s803 + $0x20] sm:$0xf]
    %v813 = vld [vmem:[%s803 + $0x24] sm:$0xf]
    %v814 = vld [vmem:[%s803 + $0x28] sm:$0xf]
    %v815 = vld [vmem:[%s803 + $0x2c] sm:$0xf]
    %v816 = vld [vmem:[%s803 + $0x30] sm:$0xf]
    %v817 = vld [vmem:[%s803 + $0x34] sm:$0xf]
    %v818 = vld [vmem:[%s803 + $0x38] sm:$0xf]
    %v819 = vld [vmem:[%s803 + $0x3c] sm:$0xf]
    %v825 = vunpack.c.l.b16 %v798
    %v826 = vunpack.c.l.b16 %v799
    %v827 = vunpack.c.l.b16 %v800
    %v828 = vunpack.c.l.b16 %v801
    %v829 = vunpack.c.l.b16 %v802
    %v830 = vpack.c.b16 %v826, %v825
    %v831 = vpack.c.b16 %v828, %v827
    %v832 = vpack.c.b16 %v829, %v829
    %v833 = vrot.slane %v830, 1
    %v834 = vrot.slane %v831, 1
    %v835 = vsel %vm235, %v833, %v834
    %v836 = vrot.slane %v832, 1
    %v837 = vsel %vm235, %v834, %v836
    %v856 = vunpack.c.l.b16 %v804
    %v857 = vunpack.c.l.b16 %v805
    %v858 = vunpack.c.l.b16 %v806
    %v859 = vunpack.c.l.b16 %v807
    %v860 = vunpack.c.l.b16 %v808
    %v861 = vunpack.c.l.b16 %v809
    %v862 = vunpack.c.l.b16 %v810
    %v863 = vunpack.c.l.b16 %v811
    %v864 = vunpack.c.l.b16 %v812
    %v865 = vunpack.c.l.b16 %v813
    %v866 = vunpack.c.l.b16 %v814
    %v867 = vunpack.c.l.b16 %v815
    %v868 = vunpack.c.l.b16 %v816
    %v869 = vunpack.c.l.b16 %v817
    %v870 = vunpack.c.l.b16 %v818
    %v871 = vunpack.c.l.b16 %v819
    %v872 = vpack.c.b16 %v857, %v856
    %v873 = vpack.c.b16 %v859, %v858
    %v874 = vpack.c.b16 %v861, %v860
    %v875 = vpack.c.b16 %v863, %v862
    %v876 = vpack.c.b16 %v865, %v864
    %v877 = vpack.c.b16 %v867, %v866
    %v878 = vpack.c.b16 %v869, %v868
    %v879 = vpack.c.b16 %v871, %v870
    %888 = vmatprep.subr.bf16.mxu0 0
    %889 = vmatpush1.bf16.msra.mxu0 %v879
    %890 = vmatprep.subr.bf16.mxu0 0
    %891 = vmatpush1.bf16.msra.mxu0 %v878
    %892 = vmatprep.subr.bf16.mxu0 0
    %893 = vmatpush1.bf16.msra.mxu0 %v877
    %894 = vmatprep.subr.bf16.mxu0 0
    %895 = vmatpush1.bf16.msra.mxu0 %v876
    %896 = vmatprep.subr.bf16.mxu0 0
    %897 = vmatpush1.bf16.msra.mxu0 %v875
    %898 = vmatprep.subr.bf16.mxu0 0
    %899 = vmatpush1.bf16.msra.mxu0 %v874
    %900 = vmatprep.subr.bf16.mxu0 0
    %901 = vmatpush1.bf16.msra.mxu0 %v873
    %902 = vmatprep.subr.bf16.mxu0 0
    %903 = vmatpush1.bf16.msra.mxu0 %v872
    %904 = vmatprep.subr.bf16.mxu0 0
    %905 = vmatpush2.bf16.msra.mxu0 0
    %906 = vmatprep.subr.bf16.mxu0 0
    %907 = vmatpush2.bf16.msra.mxu0 0
    %908 = vmatprep.subr.bf16.mxu0 0
    %909 = vmatpush2.bf16.msra.mxu0 0
    %910 = vmatprep.subr.bf16.mxu0 0
    %911 = vmatpush2.bf16.msra.mxu0 0
    %912 = vmatprep.subr.bf16.mxu0 0
    %913 = vmatpush2.bf16.msra.mxu0 0
    %914 = vmatprep.subr.bf16.mxu0 0
    %915 = vmatpush2.bf16.msra.mxu0 0
    %916 = vmatprep.subr.bf16.mxu0 0
    %917 = vmatpush2.bf16.msra.mxu0 0
    %918 = vmatprep.subr.bf16.mxu0 0
    %919 = vmatpush2.bf16.msra.mxu0 0
    %920 = vmatprep.mubr.bf16.mxu0 0
    %921 = vmatmul.mubr.bf16.gmra.mxu0 %v835
    %v922 = vpop.f32.mrf.mxu0
    %v923 = vadd.f32 0.0, %v922
    %v924 = vpop.f32.mrf.mxu0
    %v925 = vpop.f32.mrf.mxu0
    %v926 = vadd.f32 0.0, %v925
    %v927 = vpop.f32.mrf.mxu0
    %928 = vmatprep.mubr.bf16.mxu0 0
    %929 = vmatmul.mubr.bf16.gmra.mxu0 %v837
    %v930 = vpop.f32.mrf.mxu0
    %v931 = vadd.f32 0.0, %v930
    %v932 = vpop.f32.mrf.mxu0
    %v933 = vpop.f32.mrf.mxu0
    %v934 = vadd.f32 0.0, %v933
    %v935 = vpop.f32.mrf.mxu0
    %936 = vdwg.mxu0
    %v937 = vadd.f32 %v794, %v923
    %v938 = vadd.f32 %v795, %v926
    %v939 = vadd.f32 %v796, %v931
    %v940 = vadd.f32 %v797, %v934
    %941 = vst [vmem:[#allocation2] sm:$0xff] %v937
    %942 = vst [vmem:[#allocation2 + $0x8] sm:$0xff] %v938
    %943 = vst [vmem:[#allocation2 + $0x10] sm:$0xff] %v939
    %944 = vst [vmem:[#allocation2 + $0x18] sm:$0xff] %v940
    %v945 = vld [vmem:[#allocation2] sm:$0xff]
    %v946 = vld [vmem:[#allocation2 + $0x8] sm:$0xff]
    %v947 = vld [vmem:[#allocation2 + $0x10] sm:$0xff]
    %v948 = vld [vmem:[#allocation2 + $0x18] sm:$0xff]
    %v949 = vld [vmem:[#allocation3 + $0x4] sm:$0xc]
    %v950 = vld [vmem:[#allocation3 + $0x8] sm:$0xf]
    %v951 = vld [vmem:[#allocation3 + $0xc] sm:$0xf]
    %v952 = vld [vmem:[#allocation3 + $0x10] sm:$0xf]
    %v953 = vld [vmem:[#allocation3 + $0x14] sm:$0x3]
    %s954 = scalar_lea.vmem [#allocation6], 384
    %v955 = vld [vmem:[%s954] sm:$0xf]
    %v956 = vld [vmem:[%s954 + $0x4] sm:$0xf]
    %v957 = vld [vmem:[%s954 + $0x8] sm:$0xf]
    %v958 = vld [vmem:[%s954 + $0xc] sm:$0xf]
    %v959 = vld [vmem:[%s954 + $0x10] sm:$0xf]
    %v960 = vld [vmem:[%s954 + $0x14] sm:$0xf]
    %v961 = vld [vmem:[%s954 + $0x18] sm:$0xf]
    %v962 = vld [vmem:[%s954 + $0x1c] sm:$0xf]
    %v963 = vld [vmem:[%s954 + $0x20] sm:$0xf]
    %v964 = vld [vmem:[%s954 + $0x24] sm:$0xf]
    %v965 = vld [vmem:[%s954 + $0x28] sm:$0xf]
    %v966 = vld [vmem:[%s954 + $0x2c] sm:$0xf]
    %v967 = vld [vmem:[%s954 + $0x30] sm:$0xf]
    %v968 = vld [vmem:[%s954 + $0x34] sm:$0xf]
    %v969 = vld [vmem:[%s954 + $0x38] sm:$0xf]
    %v970 = vld [vmem:[%s954 + $0x3c] sm:$0xf]
    %v976 = vunpack.c.l.b16 %v949
    %v977 = vunpack.c.l.b16 %v950
    %v978 = vunpack.c.l.b16 %v951
    %v979 = vunpack.c.l.b16 %v952
    %v980 = vunpack.c.l.b16 %v953
    %v981 = vpack.c.b16 %v977, %v976
    %v982 = vpack.c.b16 %v979, %v978
    %v983 = vpack.c.b16 %v980, %v980
    %v984 = vrot.slane %v981, 2
    %v985 = vrot.slane %v982, 2
    %v986 = vsel %vm387, %v984, %v985
    %v987 = vrot.slane %v983, 2
    %v988 = vsel %vm387, %v985, %v987
    %v1007 = vunpack.c.l.b16 %v955
    %v1008 = vunpack.c.l.b16 %v956
    %v1009 = vunpack.c.l.b16 %v957
    %v1010 = vunpack.c.l.b16 %v958
    %v1011 = vunpack.c.l.b16 %v959
    %v1012 = vunpack.c.l.b16 %v960
    %v1013 = vunpack.c.l.b16 %v961
    %v1014 = vunpack.c.l.b16 %v962
    %v1015 = vunpack.c.l.b16 %v963
    %v1016 = vunpack.c.l.b16 %v964
    %v1017 = vunpack.c.l.b16 %v965
    %v1018 = vunpack.c.l.b16 %v966
    %v1019 = vunpack.c.l.b16 %v967
    %v1020 = vunpack.c.l.b16 %v968
    %v1021 = vunpack.c.l.b16 %v969
    %v1022 = vunpack.c.l.b16 %v970
    %v1023 = vpack.c.b16 %v1008, %v1007
    %v1024 = vpack.c.b16 %v1010, %v1009
    %v1025 = vpack.c.b16 %v1012, %v1011
    %v1026 = vpack.c.b16 %v1014, %v1013
    %v1027 = vpack.c.b16 %v1016, %v1015
    %v1028 = vpack.c.b16 %v1018, %v1017
    %v1029 = vpack.c.b16 %v1020, %v1019
    %v1030 = vpack.c.b16 %v1022, %v1021
    %1039 = vmatprep.subr.bf16.mxu0 0
    %1040 = vmatpush1.bf16.msra.mxu0 %v1030
    %1041 = vmatprep.subr.bf16.mxu0 0
    %1042 = vmatpush1.bf16.msra.mxu0 %v1029
    %1043 = vmatprep.subr.bf16.mxu0 0
    %1044 = vmatpush1.bf16.msra.mxu0 %v1028
    %1045 = vmatprep.subr.bf16.mxu0 0
    %1046 = vmatpush1.bf16.msra.mxu0 %v1027
    %1047 = vmatprep.subr.bf16.mxu0 0
    %1048 = vmatpush1.bf16.msra.mxu0 %v1026
    %1049 = vmatprep.subr.bf16.mxu0 0
    %1050 = vmatpush1.bf16.msra.mxu0 %v1025
    %1051 = vmatprep.subr.bf16.mxu0 0
    %1052 = vmatpush1.bf16.msra.mxu0 %v1024
    %1053 = vmatprep.subr.bf16.mxu0 0
    %1054 = vmatpush1.bf16.msra.mxu0 %v1023
    %1055 = vmatprep.subr.bf16.mxu0 0
    %1056 = vmatpush2.bf16.msra.mxu0 0
    %1057 = vmatprep.subr.bf16.mxu0 0
    %1058 = vmatpush2.bf16.msra.mxu0 0
    %1059 = vmatprep.subr.bf16.mxu0 0
    %1060 = vmatpush2.bf16.msra.mxu0 0
    %1061 = vmatprep.subr.bf16.mxu0 0
    %1062 = vmatpush2.bf16.msra.mxu0 0
    %1063 = vmatprep.subr.bf16.mxu0 0
    %1064 = vmatpush2.bf16.msra.mxu0 0
    %1065 = vmatprep.subr.bf16.mxu0 0
    %1066 = vmatpush2.bf16.msra.mxu0 0
    %1067 = vmatprep.subr.bf16.mxu0 0
    %1068 = vmatpush2.bf16.msra.mxu0 0
    %1069 = vmatprep.subr.bf16.mxu0 0
    %1070 = vmatpush2.bf16.msra.mxu0 0
    %1071 = vmatprep.mubr.bf16.mxu0 0
    %1072 = vmatmul.mubr.bf16.gmra.mxu0 %v986
    %v1073 = vpop.f32.mrf.mxu0
    %v1074 = vadd.f32 0.0, %v1073
    %v1075 = vpop.f32.mrf.mxu0
    %v1076 = vpop.f32.mrf.mxu0
    %v1077 = vadd.f32 0.0, %v1076
    %v1078 = vpop.f32.mrf.mxu0
    %1079 = vmatprep.mubr.bf16.mxu0 0
    %1080 = vmatmul.mubr.bf16.gmra.mxu0 %v988
    %v1081 = vpop.f32.mrf.mxu0
    %v1082 = vadd.f32 0.0, %v1081
    %v1083 = vpop.f32.mrf.mxu0
    %v1084 = vpop.f32.mrf.mxu0
    %v1085 = vadd.f32 0.0, %v1084
    %v1086 = vpop.f32.mrf.mxu0
    %1087 = vdwg.mxu0
    %v1088 = vadd.f32 %v945, %v1074
    %v1089 = vadd.f32 %v946, %v1077
    %v1090 = vadd.f32 %v947, %v1082
    %v1091 = vadd.f32 %v948, %v1085
    %1092 = vst [vmem:[#allocation2] sm:$0xff] %v1088
    %1093 = vst [vmem:[#allocation2 + $0x8] sm:$0xff] %v1089
    %1094 = vst [vmem:[#allocation2 + $0x10] sm:$0xff] %v1090
    %1095 = vst [vmem:[#allocation2 + $0x18] sm:$0xff] %v1091
    %v1096 = vld [vmem:[#allocation2] sm:$0x3]
    %v1097 = vld [vmem:[%s2] sm:$0x1]
    %v1099 = vlaneseq
    %v1100 = vshrl.u32 %v1099, 7
    %v1101 = vsub.s32 0, %v1100
    %v1102 = vrot.slane %v1097, %v1101
    %v1104 = vadd.f32 %v1096, %v1102
    %v1105 = vmax.f32 %v1104, 0.0
    %v1106 = vpack.c.bf16 %v1105, %v1105
    %v1107 = vld [vmem:[#allocation8] sm:$0xf]
    %v1108 = vld [vmem:[#allocation8 + $0x4] sm:$0xf]
    %v1109 = vld [vmem:[#allocation8 + $0x8] sm:$0xf]
    %v1110 = vld [vmem:[#allocation8 + $0xc] sm:$0xf]
    %v1111 = vld [vmem:[#allocation8 + $0x10] sm:$0xf]
    %v1112 = vld [vmem:[#allocation8 + $0x14] sm:$0xf]
    %v1113 = vld [vmem:[#allocation8 + $0x18] sm:$0xf]
    %v1114 = vld [vmem:[#allocation8 + $0x1c] sm:$0xf]
    %v1115 = vld [vmem:[#allocation8 + $0x20] sm:$0xf]
    %v1116 = vld [vmem:[#allocation8 + $0x24] sm:$0xf]
    %v1117 = vld [vmem:[#allocation8 + $0x28] sm:$0xf]
    %v1118 = vld [vmem:[#allocation8 + $0x2c] sm:$0xf]
    %v1119 = vld [vmem:[#allocation8 + $0x30] sm:$0xf]
    %v1120 = vld [vmem:[#allocation8 + $0x34] sm:$0xf]
    %v1121 = vld [vmem:[#allocation8 + $0x38] sm:$0xf]
    %v1122 = vld [vmem:[#allocation8 + $0x3c] sm:$0xf]
    %v1123 = vld [vmem:[#allocation2 + $0x8] sm:$0x3]
    %v1124 = vadd.f32 %v1123, %v1102
    %v1125 = vmax.f32 %v1124, 0.0
    %v1126 = vpack.c.bf16 %v1125, %v1125
    %s1127 = scalar_lea.vmem [#allocation8], 64
    %v1128 = vld [vmem:[%s1127] sm:$0xf]
    %v1129 = vld [vmem:[%s1127 + $0x4] sm:$0xf]
    %v1130 = vld [vmem:[%s1127 + $0x8] sm:$0xf]
    %v1131 = vld [vmem:[%s1127 + $0xc] sm:$0xf]
    %v1132 = vld [vmem:[%s1127 + $0x10] sm:$0xf]
    %v1133 = vld [vmem:[%s1127 + $0x14] sm:$0xf]
    %v1134 = vld [vmem:[%s1127 + $0x18] sm:$0xf]
    %v1135 = vld [vmem:[%s1127 + $0x1c] sm:$0xf]
    %v1136 = vld [vmem:[%s1127 + $0x20] sm:$0xf]
    %v1137 = vld [vmem:[%s1127 + $0x24] sm:$0xf]
    %v1138 = vld [vmem:[%s1127 + $0x28] sm:$0xf]
    %v1139 = vld [vmem:[%s1127 + $0x2c] sm:$0xf]
    %v1140 = vld [vmem:[%s1127 + $0x30] sm:$0xf]
    %v1141 = vld [vmem:[%s1127 + $0x34] sm:$0xf]
    %v1142 = vld [vmem:[%s1127 + $0x38] sm:$0xf]
    %v1143 = vld [vmem:[%s1127 + $0x3c] sm:$0xf]
    %v1160 = vunpack.c.l.b16 %v1128
    %v1161 = vunpack.c.l.b16 %v1129
    %v1162 = vunpack.c.l.b16 %v1130
    %v1163 = vunpack.c.l.b16 %v1131
    %v1164 = vunpack.c.l.b16 %v1132
    %v1165 = vunpack.c.l.b16 %v1133
    %v1166 = vunpack.c.l.b16 %v1134
    %v1167 = vunpack.c.l.b16 %v1135
    %v1168 = vunpack.c.l.b16 %v1136
    %v1169 = vunpack.c.l.b16 %v1137
    %v1170 = vunpack.c.l.b16 %v1138
    %v1171 = vunpack.c.l.b16 %v1139
    %v1172 = vunpack.c.l.b16 %v1140
    %v1173 = vunpack.c.l.b16 %v1141
    %v1174 = vunpack.c.l.b16 %v1142
    %v1175 = vunpack.c.l.b16 %v1143
    %v1176 = vpack.c.b16 %v1161, %v1160
    %v1177 = vpack.c.b16 %v1163, %v1162
    %v1178 = vpack.c.b16 %v1165, %v1164
    %v1179 = vpack.c.b16 %v1167, %v1166
    %v1180 = vpack.c.b16 %v1169, %v1168
    %v1181 = vpack.c.b16 %v1171, %v1170
    %v1182 = vpack.c.b16 %v1173, %v1172
    %v1183 = vpack.c.b16 %v1175, %v1174
    %1192 = vmatprep.subr.bf16.mxu0 0
    %1193 = vmatpush1.bf16.msra.mxu0 %v1183
    %1194 = vmatprep.subr.bf16.mxu0 0
    %1195 = vmatpush1.bf16.msra.mxu0 %v1182
    %1196 = vmatprep.subr.bf16.mxu0 0
    %1197 = vmatpush1.bf16.msra.mxu0 %v1181
    %1198 = vmatprep.subr.bf16.mxu0 0
    %1199 = vmatpush1.bf16.msra.mxu0 %v1180
    %1200 = vmatprep.subr.bf16.mxu0 0
    %1201 = vmatpush1.bf16.msra.mxu0 %v1179
    %1202 = vmatprep.subr.bf16.mxu0 0
    %1203 = vmatpush1.bf16.msra.mxu0 %v1178
    %1204 = vmatprep.subr.bf16.mxu0 0
    %1205 = vmatpush1.bf16.msra.mxu0 %v1177
    %1206 = vmatprep.subr.bf16.mxu0 0
    %1207 = vmatpush1.bf16.msra.mxu0 %v1176
    %1208 = vmatprep.subr.bf16.mxu0 0
    %1209 = vmatpush2.bf16.msra.mxu0 0
    %1210 = vmatprep.subr.bf16.mxu0 0
    %1211 = vmatpush2.bf16.msra.mxu0 0
    %1212 = vmatprep.subr.bf16.mxu0 0
    %1213 = vmatpush2.bf16.msra.mxu0 0
    %1214 = vmatprep.subr.bf16.mxu0 0
    %1215 = vmatpush2.bf16.msra.mxu0 0
    %1216 = vmatprep.subr.bf16.mxu0 0
    %1217 = vmatpush2.bf16.msra.mxu0 0
    %1218 = vmatprep.subr.bf16.mxu0 0
    %1219 = vmatpush2.bf16.msra.mxu0 0
    %1220 = vmatprep.subr.bf16.mxu0 0
    %1221 = vmatpush2.bf16.msra.mxu0 0
    %1222 = vmatprep.subr.bf16.mxu0 0
    %1223 = vmatpush2.bf16.msra.mxu0 0
    %1224 = vmatprep.mubr.bf16.mxu0 0
    %1225 = vmatmul.mubr.bf16.gmra.mxu0 %v1126
    %v1226 = vpop.f32.mrf.mxu0
    %v1227 = vadd.f32 0.0, %v1226
    %v1228 = vpop.f32.mrf.mxu0
    %v1229 = vpop.f32.mrf.mxu0
    %v1230 = vpop.f32.mrf.mxu0
    %1231 = vdwg.mxu0
    %v1248 = vunpack.c.l.b16 %v1107
    %v1249 = vunpack.c.l.b16 %v1108
    %v1250 = vunpack.c.l.b16 %v1109
    %v1251 = vunpack.c.l.b16 %v1110
    %v1252 = vunpack.c.l.b16 %v1111
    %v1253 = vunpack.c.l.b16 %v1112
    %v1254 = vunpack.c.l.b16 %v1113
    %v1255 = vunpack.c.l.b16 %v1114
    %v1256 = vunpack.c.l.b16 %v1115
    %v1257 = vunpack.c.l.b16 %v1116
    %v1258 = vunpack.c.l.b16 %v1117
    %v1259 = vunpack.c.l.b16 %v1118
    %v1260 = vunpack.c.l.b16 %v1119
    %v1261 = vunpack.c.l.b16 %v1120
    %v1262 = vunpack.c.l.b16 %v1121
    %v1263 = vunpack.c.l.b16 %v1122
    %v1264 = vpack.c.b16 %v1249, %v1248
    %v1265 = vpack.c.b16 %v1251, %v1250
    %v1266 = vpack.c.b16 %v1253, %v1252
    %v1267 = vpack.c.b16 %v1255, %v1254
    %v1268 = vpack.c.b16 %v1257, %v1256
    %v1269 = vpack.c.b16 %v1259, %v1258
    %v1270 = vpack.c.b16 %v1261, %v1260
    %v1271 = vpack.c.b16 %v1263, %v1262
    %1280 = vmatprep.subr.bf16.mxu0 0
    %1281 = vmatpush1.bf16.msra.mxu0 %v1271
    %1282 = vmatprep.subr.bf16.mxu0 0
    %1283 = vmatpush1.bf16.msra.mxu0 %v1270
    %1284 = vmatprep.subr.bf16.mxu0 0
    %1285 = vmatpush1.bf16.msra.mxu0 %v1269
    %1286 = vmatprep.subr.bf16.mxu0 0
    %1287 = vmatpush1.bf16.msra.mxu0 %v1268
    %1288 = vmatprep.subr.bf16.mxu0 0
    %1289 = vmatpush1.bf16.msra.mxu0 %v1267
    %1290 = vmatprep.subr.bf16.mxu0 0
    %1291 = vmatpush1.bf16.msra.mxu0 %v1266
    %1292 = vmatprep.subr.bf16.mxu0 0
    %1293 = vmatpush1.bf16.msra.mxu0 %v1265
    %1294 = vmatprep.subr.bf16.mxu0 0
    %1295 = vmatpush1.bf16.msra.mxu0 %v1264
    %1296 = vmatprep.subr.bf16.mxu0 0
    %1297 = vmatpush2.bf16.msra.mxu0 0
    %1298 = vmatprep.subr.bf16.mxu0 0
    %1299 = vmatpush2.bf16.msra.mxu0 0
    %1300 = vmatprep.subr.bf16.mxu0 0
    %1301 = vmatpush2.bf16.msra.mxu0 0
    %1302 = vmatprep.subr.bf16.mxu0 0
    %1303 = vmatpush2.bf16.msra.mxu0 0
    %1304 = vmatprep.subr.bf16.mxu0 0
    %1305 = vmatpush2.bf16.msra.mxu0 0
    %1306 = vmatprep.subr.bf16.mxu0 0
    %1307 = vmatpush2.bf16.msra.mxu0 0
    %1308 = vmatprep.subr.bf16.mxu0 0
    %1309 = vmatpush2.bf16.msra.mxu0 0
    %1310 = vmatprep.subr.bf16.mxu0 0
    %1311 = vmatpush2.bf16.msra.mxu0 0
    %1312 = vmatprep.mubr.bf16.mxu0 0
    %1313 = vmatmul.mubr.bf16.gmra.mxu0 %v1106
    %v1314 = vpop.f32.mrf.mxu0
    %v1315 = vadd.f32 %v1227, %v1314
    %v1316 = vpop.f32.mrf.mxu0
    %v1317 = vpop.f32.mrf.mxu0
    %v1318 = vpop.f32.mrf.mxu0
    %1319 = vdwg.mxu0
    %v1320 = vld [vmem:[#allocation2 + $0x10] sm:$0x3]
    %v1321 = vadd.f32 %v1320, %v1102
    %v1322 = vmax.f32 %v1321, 0.0
    %v1323 = vpack.c.bf16 %v1322, %v1322
    %s1324 = scalar_lea.vmem [#allocation8], 128
    %v1325 = vld [vmem:[%s1324] sm:$0xf]
    %v1326 = vld [vmem:[%s1324 + $0x4] sm:$0xf]
    %v1327 = vld [vmem:[%s1324 + $0x8] sm:$0xf]
    %v1328 = vld [vmem:[%s1324 + $0xc] sm:$0xf]
    %v1329 = vld [vmem:[%s1324 + $0x10] sm:$0xf]
    %v1330 = vld [vmem:[%s1324 + $0x14] sm:$0xf]
    %v1331 = vld [vmem:[%s1324 + $0x18] sm:$0xf]
    %v1332 = vld [vmem:[%s1324 + $0x1c] sm:$0xf]
    %v1333 = vld [vmem:[%s1324 + $0x20] sm:$0xf]
    %v1334 = vld [vmem:[%s1324 + $0x24] sm:$0xf]
    %v1335 = vld [vmem:[%s1324 + $0x28] sm:$0xf]
    %v1336 = vld [vmem:[%s1324 + $0x2c] sm:$0xf]
    %v1337 = vld [vmem:[%s1324 + $0x30] sm:$0xf]
    %v1338 = vld [vmem:[%s1324 + $0x34] sm:$0xf]
    %v1339 = vld [vmem:[%s1324 + $0x38] sm:$0xf]
    %v1340 = vld [vmem:[%s1324 + $0x3c] sm:$0xf]
    %v1357 = vunpack.c.l.b16 %v1325
    %v1358 = vunpack.c.l.b16 %v1326
    %v1359 = vunpack.c.l.b16 %v1327
    %v1360 = vunpack.c.l.b16 %v1328
    %v1361 = vunpack.c.l.b16 %v1329
    %v1362 = vunpack.c.l.b16 %v1330
    %v1363 = vunpack.c.l.b16 %v1331
    %v1364 = vunpack.c.l.b16 %v1332
    %v1365 = vunpack.c.l.b16 %v1333
    %v1366 = vunpack.c.l.b16 %v1334
    %v1367 = vunpack.c.l.b16 %v1335
    %v1368 = vunpack.c.l.b16 %v1336
    %v1369 = vunpack.c.l.b16 %v1337
    %v1370 = vunpack.c.l.b16 %v1338
    %v1371 = vunpack.c.l.b16 %v1339
    %v1372 = vunpack.c.l.b16 %v1340
    %v1373 = vpack.c.b16 %v1358, %v1357
    %v1374 = vpack.c.b16 %v1360, %v1359
    %v1375 = vpack.c.b16 %v1362, %v1361
    %v1376 = vpack.c.b16 %v1364, %v1363
    %v1377 = vpack.c.b16 %v1366, %v1365
    %v1378 = vpack.c.b16 %v1368, %v1367
    %v1379 = vpack.c.b16 %v1370, %v1369
    %v1380 = vpack.c.b16 %v1372, %v1371
    %1389 = vmatprep.subr.bf16.mxu0 0
    %1390 = vmatpush1.bf16.msra.mxu0 %v1380
    %1391 = vmatprep.subr.bf16.mxu0 0
    %1392 = vmatpush1.bf16.msra.mxu0 %v1379
    %1393 = vmatprep.subr.bf16.mxu0 0
    %1394 = vmatpush1.bf16.msra.mxu0 %v1378
    %1395 = vmatprep.subr.bf16.mxu0 0
    %1396 = vmatpush1.bf16.msra.mxu0 %v1377
    %1397 = vmatprep.subr.bf16.mxu0 0
    %1398 = vmatpush1.bf16.msra.mxu0 %v1376
    %1399 = vmatprep.subr.bf16.mxu0 0
    %1400 = vmatpush1.bf16.msra.mxu0 %v1375
    %1401 = vmatprep.subr.bf16.mxu0 0
    %1402 = vmatpush1.bf16.msra.mxu0 %v1374
    %1403 = vmatprep.subr.bf16.mxu0 0
    %1404 = vmatpush1.bf16.msra.mxu0 %v1373
    %1405 = vmatprep.subr.bf16.mxu0 0
    %1406 = vmatpush2.bf16.msra.mxu0 0
    %1407 = vmatprep.subr.bf16.mxu0 0
    %1408 = vmatpush2.bf16.msra.mxu0 0
    %1409 = vmatprep.subr.bf16.mxu0 0
    %1410 = vmatpush2.bf16.msra.mxu0 0
    %1411 = vmatprep.subr.bf16.mxu0 0
    %1412 = vmatpush2.bf16.msra.mxu0 0
    %1413 = vmatprep.subr.bf16.mxu0 0
    %1414 = vmatpush2.bf16.msra.mxu0 0
    %1415 = vmatprep.subr.bf16.mxu0 0
    %1416 = vmatpush2.bf16.msra.mxu0 0
    %1417 = vmatprep.subr.bf16.mxu0 0
    %1418 = vmatpush2.bf16.msra.mxu0 0
    %1419 = vmatprep.subr.bf16.mxu0 0
    %1420 = vmatpush2.bf16.msra.mxu0 0
    %1421 = vmatprep.mubr.bf16.mxu0 0
    %1422 = vmatmul.mubr.bf16.gmra.mxu0 %v1323
    %v1423 = vpop.f32.mrf.mxu0
    %v1424 = vadd.f32 0.0, %v1423
    %v1425 = vpop.f32.mrf.mxu0
    %v1426 = vpop.f32.mrf.mxu0
    %v1427 = vpop.f32.mrf.mxu0
    %1428 = vdwg.mxu0
    %v1429 = vadd.f32 %v1315, %v1424
    %v1430 = vld [vmem:[#allocation2 + $0x18] sm:$0x3]
    %v1431 = vadd.f32 %v1430, %v1102
    %v1432 = vmax.f32 %v1431, 0.0
    %v1433 = vpack.c.bf16 %v1432, %v1432
    %s1434 = scalar_lea.vmem [#allocation8], 192
    %v1435 = vld [vmem:[%s1434] sm:$0xf]
    %v1436 = vld [vmem:[%s1434 + $0x4] sm:$0xf]
    %v1437 = vld [vmem:[%s1434 + $0x8] sm:$0xf]
    %v1438 = vld [vmem:[%s1434 + $0xc] sm:$0xf]
    %v1439 = vld [vmem:[%s1434 + $0x10] sm:$0xf]
    %v1440 = vld [vmem:[%s1434 + $0x14] sm:$0xf]
    %v1441 = vld [vmem:[%s1434 + $0x18] sm:$0xf]
    %v1442 = vld [vmem:[%s1434 + $0x1c] sm:$0xf]
    %v1443 = vld [vmem:[%s1434 + $0x20] sm:$0xf]
    %v1444 = vld [vmem:[%s1434 + $0x24] sm:$0xf]
    %v1445 = vld [vmem:[%s1434 + $0x28] sm:$0xf]
    %v1446 = vld [vmem:[%s1434 + $0x2c] sm:$0xf]
    %v1447 = vld [vmem:[%s1434 + $0x30] sm:$0xf]
    %v1448 = vld [vmem:[%s1434 + $0x34] sm:$0xf]
    %v1449 = vld [vmem:[%s1434 + $0x38] sm:$0xf]
    %v1450 = vld [vmem:[%s1434 + $0x3c] sm:$0xf]
    %v1467 = vunpack.c.l.b16 %v1435
    %v1468 = vunpack.c.l.b16 %v1436
    %v1469 = vunpack.c.l.b16 %v1437
    %v1470 = vunpack.c.l.b16 %v1438
    %v1471 = vunpack.c.l.b16 %v1439
    %v1472 = vunpack.c.l.b16 %v1440
    %v1473 = vunpack.c.l.b16 %v1441
    %v1474 = vunpack.c.l.b16 %v1442
    %v1475 = vunpack.c.l.b16 %v1443
    %v1476 = vunpack.c.l.b16 %v1444
    %v1477 = vunpack.c.l.b16 %v1445
    %v1478 = vunpack.c.l.b16 %v1446
    %v1479 = vunpack.c.l.b16 %v1447
    %v1480 = vunpack.c.l.b16 %v1448
    %v1481 = vunpack.c.l.b16 %v1449
    %v1482 = vunpack.c.l.b16 %v1450
    %v1483 = vpack.c.b16 %v1468, %v1467
    %v1484 = vpack.c.b16 %v1470, %v1469
    %v1485 = vpack.c.b16 %v1472, %v1471
    %v1486 = vpack.c.b16 %v1474, %v1473
    %v1487 = vpack.c.b16 %v1476, %v1475
    %v1488 = vpack.c.b16 %v1478, %v1477
    %v1489 = vpack.c.b16 %v1480, %v1479
    %v1490 = vpack.c.b16 %v1482, %v1481
    %1499 = vmatprep.subr.bf16.mxu0 0
    %1500 = vmatpush1.bf16.msra.mxu0 %v1490
    %1501 = vmatprep.subr.bf16.mxu0 0
    %1502 = vmatpush1.bf16.msra.mxu0 %v1489
    %1503 = vmatprep.subr.bf16.mxu0 0
    %1504 = vmatpush1.bf16.msra.mxu0 %v1488
    %1505 = vmatprep.subr.bf16.mxu0 0
    %1506 = vmatpush1.bf16.msra.mxu0 %v1487
    %1507 = vmatprep.subr.bf16.mxu0 0
    %1508 = vmatpush1.bf16.msra.mxu0 %v1486
    %1509 = vmatprep.subr.bf16.mxu0 0
    %1510 = vmatpush1.bf16.msra.mxu0 %v1485
    %1511 = vmatprep.subr.bf16.mxu0 0
    %1512 = vmatpush1.bf16.msra.mxu0 %v1484
    %1513 = vmatprep.subr.bf16.mxu0 0
    %1514 = vmatpush1.bf16.msra.mxu0 %v1483
    %1515 = vmatprep.subr.bf16.mxu0 0
    %1516 = vmatpush2.bf16.msra.mxu0 0
    %1517 = vmatprep.subr.bf16.mxu0 0
    %1518 = vmatpush2.bf16.msra.mxu0 0
    %1519 = vmatprep.subr.bf16.mxu0 0
    %1520 = vmatpush2.bf16.msra.mxu0 0
    %1521 = vmatprep.subr.bf16.mxu0 0
    %1522 = vmatpush2.bf16.msra.mxu0 0
    %1523 = vmatprep.subr.bf16.mxu0 0
    %1524 = vmatpush2.bf16.msra.mxu0 0
    %1525 = vmatprep.subr.bf16.mxu0 0
    %1526 = vmatpush2.bf16.msra.mxu0 0
    %1527 = vmatprep.subr.bf16.mxu0 0
    %1528 = vmatpush2.bf16.msra.mxu0 0
    %1529 = vmatprep.subr.bf16.mxu0 0
    %1530 = vmatpush2.bf16.msra.mxu0 0
    %1531 = vmatprep.mubr.bf16.mxu0 0
    %1532 = vmatmul.mubr.bf16.gmra.mxu0 %v1433
    %v1533 = vpop.f32.mrf.mxu0
    %v1534 = vadd.f32 0.0, %v1533
    %v1535 = vpop.f32.mrf.mxu0
    %v1536 = vpop.f32.mrf.mxu0
    %v1537 = vpop.f32.mrf.mxu0
    %1538 = vdwg.mxu0
    %v1539 = vadd.f32 %v1429, %v1534
    %v1540 = vld [vmem:[%s4] sm:$0x1]
    %v1542 = vlaneseq
    %v1543 = vshrl.u32 %v1542, 7
    %v1544 = vsub.s32 0, %v1543
    %v1545 = vrot.slane %v1540, %v1544
    %v1547 = vadd.f32 %v1539, %v1545
    %1548 = vst [vmem:[#allocation9] sm:$0x3] %v1547
    // Predicated region
    $region34: #{tpu_custom_call.1} parent=1 // pred_check
      _
    $region35: #{tpu_custom_call.1} parent=1 // pred_check_branch
      %1550 = sbr.rel (0) target = $region37
    $region36: #{tpu_custom_call.1} parent=1 // pred_region
      %s1552 = ssub.s32 32, 32
      %1553 = vsyncadd [#allocation5], %s1552
      %s1555 = sshll.u32 [#allocation9], 4
      %s1556 = int_to_ptr.vmem [resolvable:$true] %s1555
      %1558 = dma.vmem_to_hbm [thread:$0]  %s1556, 32, %s5, [#allocation5]
    $region37: #{tpu_custom_call.1} parent=1 // pred_fallthru
      _
    // Predicated region
    $region38: #{tpu_custom_call.1} parent=1 // pred_check
      _
    $region39: #{tpu_custom_call.1} parent=1 // pred_check_branch
      %1560 = sbr.rel (0) target = $region41
    $region40: #{tpu_custom_call.1} parent=1 // pred_region
      %1561 = dma.done [#allocation5], 32
    $region41: #{tpu_custom_call.1} parent=1 // pred_fallthru
      _
    %1562 = vsyncpa [#allocation4], 1
    %1563 = vsyncpa [#allocation7], 1
    %1564 = vsyncpa [#allocation5], 1

</llo_original>
